<compile_context>
chip_gen: v6e
topology: v6e:2x2x1
jax: 0.10.0
libtpu: 0.0.40
codegen_flags: <defaults>
</compile_context>

<pallas_src>
import jax
import jax.numpy as jnp
import numpy as np
from jax.experimental import pallas as pl
from jax.experimental.pallas import tpu as pltpu

KSIZE = 7
PAD = (KSIZE - 1) // 2
KK = KSIZE * KSIZE


def _vmem_limit_bytes():
    """Detected VMEM capacity -> explicit scoped-VMEM limit (with headroom)."""
    cap = 64 << 20                        # conservative default (v7x physical)
    try:
        info = pltpu.get_tpu_info()
        cap = int(getattr(info, "vmem_capacity_bytes", cap) or cap)
    except Exception:
        pass
    return int(max(32 << 20, min(cap - (8 << 20), 96 << 20)))


def _pick_tile(total, cap, quantum):
    """Largest divisor of `total` that is a multiple of `quantum` and <= cap.
    Falls back to the full extent (always a legal Mosaic block dim)."""
    cap = max(1, cap)
    best = None
    d = 1
    while d * d <= total:
        if total % d == 0:
            for cand in (d, total // d):
                if cand <= cap and cand % quantum == 0 and (best is None or cand > best):
                    best = cand
        d += 1
    return best if best is not None else total


def _conv7_sigmoid(pmax, pmean, w_ref, b_ref, H, W):
    """sigmoid(7x7 'same' conv of the 2-channel pooled map), evaluated on the
    flattened lane-dense (1, H*W) layout with XLU rolls + border masks.

    Restructured per review: 7 column-shifted + column-masked copies per
    pooled channel are built once (12 rolls), all kw weighting is pure VPU
    work, then one row roll + row mask per kh (6 more rolls) -> 18 rolls total
    instead of 96.  Column masks commute with the row roll because a dy*W
    shift preserves the column index.
    """
    HW = H * W
    pos = jax.lax.broadcasted_iota(jnp.int32, (1, HW), 1)
    col = (pos & (W - 1)) if (W & (W - 1)) == 0 else (pos % W)

    cs = []                                    # cs[ci][kw]: (1, HW) f32
    for src in (pmax, pmean):
        per_kw = []
        for kw in range(KSIZE):
            dx = kw - PAD
            sh = (-dx) % HW
            shifted = src if sh == 0 else pltpu.roll(src, sh, axis=1)
            ok = jnp.logical_and(col + dx >= 0, col + dx < W)
            per_kw.append(jnp.where(ok, shifted, 0.0))
        cs.append(per_kw)

    acc = jnp.full((1, HW), b_ref[0], dtype=jnp.float32)
    for kh in range(KSIZE):
        dy = kh - PAD
        rowsum = jnp.zeros((1, HW), jnp.float32)
        for ci in range(2):
            for kw in range(KSIZE):
                rowsum = rowsum + w_ref[ci * KK + kh * KSIZE + kw] * cs[ci][kw]
        sh_row = (-dy * W) % HW
        rolled = rowsum if sh_row == 0 else pltpu.roll(rowsum, sh_row, axis=1)
        okr = jnp.logical_and(pos + dy * W >= 0, pos + dy * W < HW)
        acc = acc + jnp.where(okr, rolled, 0.0)
    # TODO(synk): for extremely large H*W (>~512x512) chunk this conv over row
    # blocks with a 3-row halo to bound the live (1,HW) f32 temporaries.
    return jax.nn.sigmoid(acc)


# --------------------------- fused single kernel ----------------------------

def _make_fused_kernel(H, W, C):
    def kernel(w_ref, b_ref, x_ref, o_ref):
        # x_ref/o_ref: VMEM (1, C, HW) full sample (lane-dense); w/b in SMEM.
        xf = x_ref[0].astype(jnp.float32)                      # (C, HW)
        pmax = jnp.max(xf, axis=0, keepdims=True)              # (1, HW)
        pmean = jnp.sum(xf, axis=0, keepdims=True) * (1.0 / C)
        gate = _conv7_sigmoid(pmax, pmean, w_ref, b_ref, H, W)  # (1, HW)
        o_ref[0] = (xf * gate).astype(o_ref.dtype)
    return kernel


# --------------------- fallback: pool / gate / multiply ---------------------

def _make_pool_kernel(C):
    def kernel(x_ref, mx_ref, mn_ref):
        # x_ref: (1, tc, thw); mx_ref/mn_ref: (1, 1, thw) f32, resident across
        # the trailing (arbitrary) C grid axis and used as accumulators.
        c = pl.program_id(2)
        xt = x_ref[0].astype(jnp.float32)
        tmax = jnp.max(xt, axis=0, keepdims=True)
        tsum = jnp.sum(xt, axis=0, keepdims=True)

        @pl.when(c == 0)
        def _():
            mx_ref[0] = tmax
            mn_ref[0] = tsum

        @pl.when(c > 0)
        def _():
            mx_ref[0] = jnp.maximum(mx_ref[0], tmax)
            mn_ref[0] = mn_ref[0] + tsum

        @pl.when(c == pl.num_programs(2) - 1)
        def _():
            mn_ref[0] = mn_ref[0] * (1.0 / C)
    return kernel


def _make_gate_kernel(H, W):
    def kernel(w_ref, b_ref, mx_ref, mn_ref, g_ref):
        g_ref[0] = _conv7_sigmoid(mx_ref[0].astype(jnp.float32),
                                  mn_ref[0].astype(jnp.float32),
                                  w_ref, b_ref, H, W)
    return kernel


def _apply_gate_kernel(x_ref, g_ref, o_ref):
    # x_ref/o_ref: (1, tc, thw) lane-dense tiles; g_ref: (1, 1, thw) f32.
    o_ref[0] = (x_ref[0].astype(jnp.float32) * g_ref[0]).astype(o_ref.dtype)


# --------------------------------- wrapper ----------------------------------

def cbam_spatial(x, conv_w, bn_gamma, bn_beta, bn_mean, bn_var, eps=1e-5, *,
                 force_two_pass=False, max_block_elems=None):
    """x: (N, C, H, W). conv_w: (1, 2, 7, 7). BN params: (1,). Eval-mode BN."""
    N, C, H, W = x.shape
    HW = H * W
    itemsize = x.dtype.itemsize

    # Fold eval-mode BatchNorm into the conv: y = s*conv(p) + (beta - s*mean).
    s = bn_gamma / jnp.sqrt(bn_var + eps)                              # (1,)
    w_eff = (conv_w[0] * s[0]).reshape(-1).astype(jnp.float32)         # (98,)
    b_eff = (bn_beta - bn_mean * s).reshape(1).astype(jnp.float32)     # (1,)

    xf = x.reshape(N, C, HW)         # lane-dense view; free for NCHW layout
    vlimit = _vmem_limit_bytes()
    smem_specs = [pl.BlockSpec(memory_space=pltpu.MemorySpace.SMEM)] * 2

    # ---------------- Fused path: x read once + written once ----------------
    per_sample = C * HW * itemsize
    fused_need = 4 * per_sample + C * HW * 4 + 40 * HW * 4 + (2 << 20)
    if not force_two_pass and fused_need <= int(0.9 * vlimit):
        out = pl.pallas_call(
            _make_fused_kernel(H, W, C),
            out_shape=jax.ShapeDtypeStruct((N, C, HW), x.dtype),
            grid_spec=pltpu.PrefetchScalarGridSpec(
                num_scalar_prefetch=0,
                grid=(N,),
                in_specs=smem_specs + [pl.BlockSpec((1, C, HW), lambda n: (n, 0, 0))],
                out_specs=pl.BlockSpec((1, C, HW), lambda n: (n, 0, 0)),
            ),
            compiler_params=pltpu.CompilerParams(
                dimension_semantics=("parallel",), vmem_limit_bytes=vlimit),
        )(w_eff, b_eff, xf)
        return out.reshape(N, C, H, W)

    # ------------- Fallback: pooling / gate / multiply (large samples) ------
    budget = max_block_elems if max_block_elems else (8 << 20) // itemsize
    thw = _pick_tile(HW, max(128, budget // 8), 128)
    tc = _pick_tile(C, max(8, budget // thw), 8)

    # (1) Channel pooling, tiled over (N, HW, C); accumulates in the resident
    #     output blocks across the trailing (arbitrary) C axis.
    pmax, pmean = pl.pallas_call(
        _make_pool_kernel(C),
        out_shape=(jax.ShapeDtypeStruct((N, 1, HW), jnp.float32),
                   jax.ShapeDtypeStruct((N, 1, HW), jnp.float32)),
        grid_spec=pltpu.PrefetchScalarGridSpec(
            num_scalar_prefetch=0,
            grid=(N, HW // thw, C // tc),
            in_specs=[pl.BlockSpec((1, tc, thw), lambda n, t, c: (n, c, t))],
            out_specs=[pl.BlockSpec((1, 1, thw), lambda n, t, c: (n, 0, t)),
                       pl.BlockSpec((1, 1, thw), lambda n, t, c: (n, 0, t))],
        ),
        compiler_params=pltpu.CompilerParams(
            dimension_semantics=("parallel", "parallel", "arbitrary"),
            vmem_limit_bytes=vlimit),
    )(xf)

    # (2) 7x7 conv (BN folded) + sigmoid on the tiny pooled maps.
    gate = pl.pallas_call(
        _make_gate_kernel(H, W),
        out_shape=jax.ShapeDtypeStruct((N, 1, HW), jnp.float32),
        grid_spec=pltpu.PrefetchScalarGridSpec(
            num_scalar_prefetch=0,
            grid=(N,),
            in_specs=smem_specs + [pl.BlockSpec((1, 1, HW), lambda n: (n, 0, 0)),
                                   pl.BlockSpec((1, 1, HW), lambda n: (n, 0, 0))],
            out_specs=pl.BlockSpec((1, 1, HW), lambda n: (n, 0, 0)),
        ),
        compiler_params=pltpu.CompilerParams(
            dimension_semantics=("parallel",), vmem_limit_bytes=vlimit),
    )(w_eff, b_eff, pmax, pmean)

    # (3) Streaming lane-dense broadcast multiply; C innermost and the gate
    #     index_map ignores it, so the gate tile stays resident in VMEM.
    out = pl.pallas_call(
        _apply_gate_kernel,
        out_shape=jax.ShapeDtypeStruct((N, C, HW), x.dtype),
        grid_spec=pltpu.PrefetchScalarGridSpec(
            num_scalar_prefetch=0,
            grid=(N, HW // thw, C // tc),
            in_specs=[pl.BlockSpec((1, tc, thw), lambda n, t, c: (n, c, t)),
                      pl.BlockSpec((1, 1, thw), lambda n, t, c: (n, 0, t))],
            out_specs=pl.BlockSpec((1, tc, thw), lambda n, t, c: (n, c, t)),
        ),
        compiler_params=pltpu.CompilerParams(
            dimension_semantics=("parallel", "parallel", "parallel"),
            vmem_limit_bytes=vlimit),
    )(xf, gate)

    return out.reshape(N, C, H, W)


# -------------------------------- reference ---------------------------------

def _reference(x, conv_w, bn_gamma, bn_beta, bn_mean, bn_var, eps=1e-5):
    pooled = jnp.concatenate(
        [jnp.max(x, axis=1, keepdims=True), jnp.mean(x, axis=1, keepdims=True)],
        axis=1)
    y = jax.lax.conv_general_dilated(
        pooled, conv_w, window_strides=(1, 1),
        padding=[(PAD, PAD), (PAD, PAD)],
        dimension_numbers=("NCHW", "OIHW", "NCHW"))
    y = (y - bn_mean.reshape(1, -1, 1, 1)) / jnp.sqrt(
        bn_var.reshape(1, -1, 1, 1) + eps)
    y = y * bn_gamma.reshape(1, -1, 1, 1) + bn_beta.reshape(1, -1, 1, 1)
    return x * jax.nn.sigmoid(y)


if __name__ == "__main__":
    key = jax.random.PRNGKey(0)
    kx1, kx2, kw = jax.random.split(key, 3)

    # Conv2d(2, 1, kernel_size=7, bias=False) weight + non-trivial eval-mode BN
    conv_w = 0.05 * jax.random.normal(kw, (1, 2, KSIZE, KSIZE), dtype=jnp.float32)
    bn_gamma = jnp.full((1,), 1.3, jnp.float32)
    bn_beta = jnp.full((1,), 0.1, jnp.float32)
    bn_mean = jnp.full((1,), 0.05, jnp.float32)
    bn_var = jnp.full((1,), 0.8, jnp.float32)
    bn = (bn_gamma, bn_beta, bn_mean, bn_var)

    # 1) Fused single-kernel path (typical case).
    x1 = jax.random.normal(kx1, (2, 4, 16, 16), dtype=jnp.float32)
    out1 = jax.block_until_ready(cbam_spatial(x1, conv_w, *bn))
    np.testing.assert_allclose(np.asarray(out1),
                               np.asarray(_reference(x1, conv_w, *bn)),
                               rtol=1e-5, atol=1e-5)

    # 2) Tiled pooling/gate/multiply fallback path, forced with tiny blocks to
    #    exercise the C-reduction and spatial tiling.
    x2 = jax.random.normal(kx2, (2, 16, 16, 16), dtype=jnp.float32)
    out2 = jax.block_until_ready(
        cbam_spatial(x2, conv_w, *bn, force_two_pass=True, max_block_elems=1024))
    np.testing.assert_allclose(np.asarray(out2),
                               np.asarray(_reference(x2, conv_w, *bn)),
                               rtol=1e-5, atol=1e-5)

    print("KERNEL_OK")
</pallas_src>

<mosaic_0001>
module attributes {stable_mosaic.version = 11 : i64} {
  func.func @kernel(%arg0: i32, %arg1: memref<98xf32, #tpu.memory_space<smem>>, %arg2: memref<1xf32, #tpu.memory_space<smem>>, %arg3: memref<1x4x256xf32, #tpu.memory_space<vmem>>, %arg4: memref<1x4x256xf32, #tpu.memory_space<vmem>>) attributes {dimension_semantics = [#tpu.dimension_semantics<parallel>], iteration_bounds = array<i64: 2>, scalar_prefetch = 0 : i64, scratch_operands = 0 : i64, tpu.core_type = #tpu.core_type<tc>, window_params = [{transform_indices = @transform_0, window_bounds = array<i64: 98>}, {transform_indices = @transform_1, window_bounds = array<i64: 1>}, {transform_indices = @transform_2, window_bounds = array<i64: 1, 4, 256>}, {transform_indices = @transform_3, window_bounds = array<i64: 1, 4, 256>}]} {
    %c0 = arith.constant 0 : index
    %c0_0 = arith.constant 0 : index
    %c0_1 = arith.constant 0 : index
    %0 = vector.load %arg3[%c0, %c0_0, %c0_1] : memref<1x4x256xf32, #tpu.memory_space<vmem>>, vector<1x4x256xf32>
    %1 = vector.shape_cast %0 : vector<1x4x256xf32> to vector<4x256xf32>
    %cst = arith.constant dense<0xFF800000> : vector<256xf32>
    %2 = vector.multi_reduction <maximumf>, %1, %cst [0] : vector<4x256xf32> to vector<256xf32>
    %3 = vector.shape_cast %2 : vector<256xf32> to vector<1x256xf32>
    %cst_2 = arith.constant dense<0.000000e+00> : vector<256xf32>
    %4 = vector.multi_reduction <add>, %1, %cst_2 [0] : vector<4x256xf32> to vector<256xf32>
    %5 = vector.shape_cast %4 : vector<256xf32> to vector<1x256xf32>
    %cst_3 = arith.constant 2.500000e-01 : f32
    %6 = vector.broadcast %cst_3 : f32 to vector<1x256xf32>
    %7 = arith.mulf %5, %6 : vector<1x256xf32>
    %8 = tpu.iota {dimensions = array<i32: 1>} : vector<1x256xi32>
    %c15_i32 = arith.constant 15 : i32
    %9 = vector.broadcast %c15_i32 : i32 to vector<1x256xi32>
    %10 = arith.andi %8, %9 : vector<1x256xi32>
    %c3_i32 = arith.constant 3 : i32
    %11 = tpu.dynamic_rotate %3 by %c3_i32 dim 1 : vector<1x256xf32>, i32 -> vector<1x256xf32>
    %c-3_i32 = arith.constant -3 : i32
    %12 = vector.broadcast %c-3_i32 : i32 to vector<1x256xi32>
    %13 = arith.addi %10, %12 : vector<1x256xi32>
    %c0_i32 = arith.constant 0 : i32
    %14 = vector.broadcast %c0_i32 : i32 to vector<1x256xi32>
    %15 = arith.cmpi sge, %13, %14 : vector<1x256xi32>
    %c-3_i32_4 = arith.constant -3 : i32
    %16 = vector.broadcast %c-3_i32_4 : i32 to vector<1x256xi32>
    %17 = arith.addi %10, %16 : vector<1x256xi32>
    %c16_i32 = arith.constant 16 : i32
    %18 = vector.broadcast %c16_i32 : i32 to vector<1x256xi32>
    %19 = arith.cmpi slt, %17, %18 : vector<1x256xi32>
    %20 = arith.andi %15, %19 : vector<1x256xi1>
    %cst_5 = arith.constant 0.000000e+00 : f32
    %21 = vector.broadcast %cst_5 : f32 to vector<1x256xf32>
    %22 = arith.select %20, %11, %21 : vector<1x256xi1>, vector<1x256xf32>
    %c2_i32 = arith.constant 2 : i32
    %23 = tpu.dynamic_rotate %3 by %c2_i32 dim 1 : vector<1x256xf32>, i32 -> vector<1x256xf32>
    %c-2_i32 = arith.constant -2 : i32
    %24 = vector.broadcast %c-2_i32 : i32 to vector<1x256xi32>
    %25 = arith.addi %10, %24 : vector<1x256xi32>
    %c0_i32_6 = arith.constant 0 : i32
    %26 = vector.broadcast %c0_i32_6 : i32 to vector<1x256xi32>
    %27 = arith.cmpi sge, %25, %26 : vector<1x256xi32>
    %c-2_i32_7 = arith.constant -2 : i32
    %28 = vector.broadcast %c-2_i32_7 : i32 to vector<1x256xi32>
    %29 = arith.addi %10, %28 : vector<1x256xi32>
    %c16_i32_8 = arith.constant 16 : i32
    %30 = vector.broadcast %c16_i32_8 : i32 to vector<1x256xi32>
    %31 = arith.cmpi slt, %29, %30 : vector<1x256xi32>
    %32 = arith.andi %27, %31 : vector<1x256xi1>
    %cst_9 = arith.constant 0.000000e+00 : f32
    %33 = vector.broadcast %cst_9 : f32 to vector<1x256xf32>
    %34 = arith.select %32, %23, %33 : vector<1x256xi1>, vector<1x256xf32>
    %c1_i32 = arith.constant 1 : i32
    %35 = tpu.dynamic_rotate %3 by %c1_i32 dim 1 : vector<1x256xf32>, i32 -> vector<1x256xf32>
    %c-1_i32 = arith.constant -1 : i32
    %36 = vector.broadcast %c-1_i32 : i32 to vector<1x256xi32>
    %37 = arith.addi %10, %36 : vector<1x256xi32>
    %c0_i32_10 = arith.constant 0 : i32
    %38 = vector.broadcast %c0_i32_10 : i32 to vector<1x256xi32>
    %39 = arith.cmpi sge, %37, %38 : vector<1x256xi32>
    %c-1_i32_11 = arith.constant -1 : i32
    %40 = vector.broadcast %c-1_i32_11 : i32 to vector<1x256xi32>
    %41 = arith.addi %10, %40 : vector<1x256xi32>
    %c16_i32_12 = arith.constant 16 : i32
    %42 = vector.broadcast %c16_i32_12 : i32 to vector<1x256xi32>
    %43 = arith.cmpi slt, %41, %42 : vector<1x256xi32>
    %44 = arith.andi %39, %43 : vector<1x256xi1>
    %cst_13 = arith.constant 0.000000e+00 : f32
    %45 = vector.broadcast %cst_13 : f32 to vector<1x256xf32>
    %46 = arith.select %44, %35, %45 : vector<1x256xi1>, vector<1x256xf32>
    %c0_i32_14 = arith.constant 0 : i32
    %47 = vector.broadcast %c0_i32_14 : i32 to vector<1x256xi32>
    %48 = arith.addi %10, %47 : vector<1x256xi32>
    %c0_i32_15 = arith.constant 0 : i32
    %49 = vector.broadcast %c0_i32_15 : i32 to vector<1x256xi32>
    %50 = arith.cmpi sge, %48, %49 : vector<1x256xi32>
    %c0_i32_16 = arith.constant 0 : i32
    %51 = vector.broadcast %c0_i32_16 : i32 to vector<1x256xi32>
    %52 = arith.addi %10, %51 : vector<1x256xi32>
    %c16_i32_17 = arith.constant 16 : i32
    %53 = vector.broadcast %c16_i32_17 : i32 to vector<1x256xi32>
    %54 = arith.cmpi slt, %52, %53 : vector<1x256xi32>
    %55 = arith.andi %50, %54 : vector<1x256xi1>
    %cst_18 = arith.constant 0.000000e+00 : f32
    %56 = vector.broadcast %cst_18 : f32 to vector<1x256xf32>
    %57 = arith.select %55, %3, %56 : vector<1x256xi1>, vector<1x256xf32>
    %c255_i32 = arith.constant 255 : i32
    %58 = tpu.dynamic_rotate %3 by %c255_i32 dim 1 : vector<1x256xf32>, i32 -> vector<1x256xf32>
    %c1_i32_19 = arith.constant 1 : i32
    %59 = vector.broadcast %c1_i32_19 : i32 to vector<1x256xi32>
    %60 = arith.addi %10, %59 : vector<1x256xi32>
    %c0_i32_20 = arith.constant 0 : i32
    %61 = vector.broadcast %c0_i32_20 : i32 to vector<1x256xi32>
    %62 = arith.cmpi sge, %60, %61 : vector<1x256xi32>
    %c1_i32_21 = arith.constant 1 : i32
    %63 = vector.broadcast %c1_i32_21 : i32 to vector<1x256xi32>
    %64 = arith.addi %10, %63 : vector<1x256xi32>
    %c16_i32_22 = arith.constant 16 : i32
    %65 = vector.broadcast %c16_i32_22 : i32 to vector<1x256xi32>
    %66 = arith.cmpi slt, %64, %65 : vector<1x256xi32>
    %67 = arith.andi %62, %66 : vector<1x256xi1>
    %cst_23 = arith.constant 0.000000e+00 : f32
    %68 = vector.broadcast %cst_23 : f32 to vector<1x256xf32>
    %69 = arith.select %67, %58, %68 : vector<1x256xi1>, vector<1x256xf32>
    %c254_i32 = arith.constant 254 : i32
    %70 = tpu.dynamic_rotate %3 by %c254_i32 dim 1 : vector<1x256xf32>, i32 -> vector<1x256xf32>
    %c2_i32_24 = arith.constant 2 : i32
    %71 = vector.broadcast %c2_i32_24 : i32 to vector<1x256xi32>
    %72 = arith.addi %10, %71 : vector<1x256xi32>
    %c0_i32_25 = arith.constant 0 : i32
    %73 = vector.broadcast %c0_i32_25 : i32 to vector<1x256xi32>
    %74 = arith.cmpi sge, %72, %73 : vector<1x256xi32>
    %c2_i32_26 = arith.constant 2 : i32
    %75 = vector.broadcast %c2_i32_26 : i32 to vector<1x256xi32>
    %76 = arith.addi %10, %75 : vector<1x256xi32>
    %c16_i32_27 = arith.constant 16 : i32
    %77 = vector.broadcast %c16_i32_27 : i32 to vector<1x256xi32>
    %78 = arith.cmpi slt, %76, %77 : vector<1x256xi32>
    %79 = arith.andi %74, %78 : vector<1x256xi1>
    %cst_28 = arith.constant 0.000000e+00 : f32
    %80 = vector.broadcast %cst_28 : f32 to vector<1x256xf32>
    %81 = arith.select %79, %70, %80 : vector<1x256xi1>, vector<1x256xf32>
    %c253_i32 = arith.constant 253 : i32
    %82 = tpu.dynamic_rotate %3 by %c253_i32 dim 1 : vector<1x256xf32>, i32 -> vector<1x256xf32>
    %c3_i32_29 = arith.constant 3 : i32
    %83 = vector.broadcast %c3_i32_29 : i32 to vector<1x256xi32>
    %84 = arith.addi %10, %83 : vector<1x256xi32>
    %c0_i32_30 = arith.constant 0 : i32
    %85 = vector.broadcast %c0_i32_30 : i32 to vector<1x256xi32>
    %86 = arith.cmpi sge, %84, %85 : vector<1x256xi32>
    %c3_i32_31 = arith.constant 3 : i32
    %87 = vector.broadcast %c3_i32_31 : i32 to vector<1x256xi32>
    %88 = arith.addi %10, %87 : vector<1x256xi32>
    %c16_i32_32 = arith.constant 16 : i32
    %89 = vector.broadcast %c16_i32_32 : i32 to vector<1x256xi32>
    %90 = arith.cmpi slt, %88, %89 : vector<1x256xi32>
    %91 = arith.andi %86, %90 : vector<1x256xi1>
    %cst_33 = arith.constant 0.000000e+00 : f32
    %92 = vector.broadcast %cst_33 : f32 to vector<1x256xf32>
    %93 = arith.select %91, %82, %92 : vector<1x256xi1>, vector<1x256xf32>
    %c3_i32_34 = arith.constant 3 : i32
    %94 = tpu.dynamic_rotate %7 by %c3_i32_34 dim 1 : vector<1x256xf32>, i32 -> vector<1x256xf32>
    %c-3_i32_35 = arith.constant -3 : i32
    %95 = vector.broadcast %c-3_i32_35 : i32 to vector<1x256xi32>
    %96 = arith.addi %10, %95 : vector<1x256xi32>
    %c0_i32_36 = arith.constant 0 : i32
    %97 = vector.broadcast %c0_i32_36 : i32 to vector<1x256xi32>
    %98 = arith.cmpi sge, %96, %97 : vector<1x256xi32>
    %c-3_i32_37 = arith.constant -3 : i32
    %99 = vector.broadcast %c-3_i32_37 : i32 to vector<1x256xi32>
    %100 = arith.addi %10, %99 : vector<1x256xi32>
    %c16_i32_38 = arith.constant 16 : i32
    %101 = vector.broadcast %c16_i32_38 : i32 to vector<1x256xi32>
    %102 = arith.cmpi slt, %100, %101 : vector<1x256xi32>
    %103 = arith.andi %98, %102 : vector<1x256xi1>
    %cst_39 = arith.constant 0.000000e+00 : f32
    %104 = vector.broadcast %cst_39 : f32 to vector<1x256xf32>
    %105 = arith.select %103, %94, %104 : vector<1x256xi1>, vector<1x256xf32>
    %c2_i32_40 = arith.constant 2 : i32
    %106 = tpu.dynamic_rotate %7 by %c2_i32_40 dim 1 : vector<1x256xf32>, i32 -> vector<1x256xf32>
    %c-2_i32_41 = arith.constant -2 : i32
    %107 = vector.broadcast %c-2_i32_41 : i32 to vector<1x256xi32>
    %108 = arith.addi %10, %107 : vector<1x256xi32>
    %c0_i32_42 = arith.constant 0 : i32
    %109 = vector.broadcast %c0_i32_42 : i32 to vector<1x256xi32>
    %110 = arith.cmpi sge, %108, %109 : vector<1x256xi32>
    %c-2_i32_43 = arith.constant -2 : i32
    %111 = vector.broadcast %c-2_i32_43 : i32 to vector<1x256xi32>
    %112 = arith.addi %10, %111 : vector<1x256xi32>
    %c16_i32_44 = arith.constant 16 : i32
    %113 = vector.broadcast %c16_i32_44 : i32 to vector<1x256xi32>
    %114 = arith.cmpi slt, %112, %113 : vector<1x256xi32>
    %115 = arith.andi %110, %114 : vector<1x256xi1>
    %cst_45 = arith.constant 0.000000e+00 : f32
    %116 = vector.broadcast %cst_45 : f32 to vector<1x256xf32>
    %117 = arith.select %115, %106, %116 : vector<1x256xi1>, vector<1x256xf32>
    %c1_i32_46 = arith.constant 1 : i32
    %118 = tpu.dynamic_rotate %7 by %c1_i32_46 dim 1 : vector<1x256xf32>, i32 -> vector<1x256xf32>
    %c-1_i32_47 = arith.constant -1 : i32
    %119 = vector.broadcast %c-1_i32_47 : i32 to vector<1x256xi32>
    %120 = arith.addi %10, %119 : vector<1x256xi32>
    %c0_i32_48 = arith.constant 0 : i32
    %121 = vector.broadcast %c0_i32_48 : i32 to vector<1x256xi32>
    %122 = arith.cmpi sge, %120, %121 : vector<1x256xi32>
    %c-1_i32_49 = arith.constant -1 : i32
    %123 = vector.broadcast %c-1_i32_49 : i32 to vector<1x256xi32>
    %124 = arith.addi %10, %123 : vector<1x256xi32>
    %c16_i32_50 = arith.constant 16 : i32
    %125 = vector.broadcast %c16_i32_50 : i32 to vector<1x256xi32>
    %126 = arith.cmpi slt, %124, %125 : vector<1x256xi32>
    %127 = arith.andi %122, %126 : vector<1x256xi1>
    %cst_51 = arith.constant 0.000000e+00 : f32
    %128 = vector.broadcast %cst_51 : f32 to vector<1x256xf32>
    %129 = arith.select %127, %118, %128 : vector<1x256xi1>, vector<1x256xf32>
    %c0_i32_52 = arith.constant 0 : i32
    %130 = vector.broadcast %c0_i32_52 : i32 to vector<1x256xi32>
    %131 = arith.addi %10, %130 : vector<1x256xi32>
    %c0_i32_53 = arith.constant 0 : i32
    %132 = vector.broadcast %c0_i32_53 : i32 to vector<1x256xi32>
    %133 = arith.cmpi sge, %131, %132 : vector<1x256xi32>
    %c0_i32_54 = arith.constant 0 : i32
    %134 = vector.broadcast %c0_i32_54 : i32 to vector<1x256xi32>
    %135 = arith.addi %10, %134 : vector<1x256xi32>
    %c16_i32_55 = arith.constant 16 : i32
    %136 = vector.broadcast %c16_i32_55 : i32 to vector<1x256xi32>
    %137 = arith.cmpi slt, %135, %136 : vector<1x256xi32>
    %138 = arith.andi %133, %137 : vector<1x256xi1>
    %cst_56 = arith.constant 0.000000e+00 : f32
    %139 = vector.broadcast %cst_56 : f32 to vector<1x256xf32>
    %140 = arith.select %138, %7, %139 : vector<1x256xi1>, vector<1x256xf32>
    %c255_i32_57 = arith.constant 255 : i32
    %141 = tpu.dynamic_rotate %7 by %c255_i32_57 dim 1 : vector<1x256xf32>, i32 -> vector<1x256xf32>
    %c1_i32_58 = arith.constant 1 : i32
    %142 = vector.broadcast %c1_i32_58 : i32 to vector<1x256xi32>
    %143 = arith.addi %10, %142 : vector<1x256xi32>
    %c0_i32_59 = arith.constant 0 : i32
    %144 = vector.broadcast %c0_i32_59 : i32 to vector<1x256xi32>
    %145 = arith.cmpi sge, %143, %144 : vector<1x256xi32>
    %c1_i32_60 = arith.constant 1 : i32
    %146 = vector.broadcast %c1_i32_60 : i32 to vector<1x256xi32>
    %147 = arith.addi %10, %146 : vector<1x256xi32>
    %c16_i32_61 = arith.constant 16 : i32
    %148 = vector.broadcast %c16_i32_61 : i32 to vector<1x256xi32>
    %149 = arith.cmpi slt, %147, %148 : vector<1x256xi32>
    %150 = arith.andi %145, %149 : vector<1x256xi1>
    %cst_62 = arith.constant 0.000000e+00 : f32
    %151 = vector.broadcast %cst_62 : f32 to vector<1x256xf32>
    %152 = arith.select %150, %141, %151 : vector<1x256xi1>, vector<1x256xf32>
    %c254_i32_63 = arith.constant 254 : i32
    %153 = tpu.dynamic_rotate %7 by %c254_i32_63 dim 1 : vector<1x256xf32>, i32 -> vector<1x256xf32>
    %c2_i32_64 = arith.constant 2 : i32
    %154 = vector.broadcast %c2_i32_64 : i32 to vector<1x256xi32>
    %155 = arith.addi %10, %154 : vector<1x256xi32>
    %c0_i32_65 = arith.constant 0 : i32
    %156 = vector.broadcast %c0_i32_65 : i32 to vector<1x256xi32>
    %157 = arith.cmpi sge, %155, %156 : vector<1x256xi32>
    %c2_i32_66 = arith.constant 2 : i32
    %158 = vector.broadcast %c2_i32_66 : i32 to vector<1x256xi32>
    %159 = arith.addi %10, %158 : vector<1x256xi32>
    %c16_i32_67 = arith.constant 16 : i32
    %160 = vector.broadcast %c16_i32_67 : i32 to vector<1x256xi32>
    %161 = arith.cmpi slt, %159, %160 : vector<1x256xi32>
    %162 = arith.andi %157, %161 : vector<1x256xi1>
    %cst_68 = arith.constant 0.000000e+00 : f32
    %163 = vector.broadcast %cst_68 : f32 to vector<1x256xf32>
    %164 = arith.select %162, %153, %163 : vector<1x256xi1>, vector<1x256xf32>
    %c253_i32_69 = arith.constant 253 : i32
    %165 = tpu.dynamic_rotate %7 by %c253_i32_69 dim 1 : vector<1x256xf32>, i32 -> vector<1x256xf32>
    %c3_i32_70 = arith.constant 3 : i32
    %166 = vector.broadcast %c3_i32_70 : i32 to vector<1x256xi32>
    %167 = arith.addi %10, %166 : vector<1x256xi32>
    %c0_i32_71 = arith.constant 0 : i32
    %168 = vector.broadcast %c0_i32_71 : i32 to vector<1x256xi32>
    %169 = arith.cmpi sge, %167, %168 : vector<1x256xi32>
    %c3_i32_72 = arith.constant 3 : i32
    %170 = vector.broadcast %c3_i32_72 : i32 to vector<1x256xi32>
    %171 = arith.addi %10, %170 : vector<1x256xi32>
    %c16_i32_73 = arith.constant 16 : i32
    %172 = vector.broadcast %c16_i32_73 : i32 to vector<1x256xi32>
    %173 = arith.cmpi slt, %171, %172 : vector<1x256xi32>
    %174 = arith.andi %169, %173 : vector<1x256xi1>
    %cst_74 = arith.constant 0.000000e+00 : f32
    %175 = vector.broadcast %cst_74 : f32 to vector<1x256xf32>
    %176 = arith.select %174, %165, %175 : vector<1x256xi1>, vector<1x256xf32>
    %c0_75 = arith.constant 0 : index
    %177 = memref.load %arg2[%c0_75] : memref<1xf32, #tpu.memory_space<smem>>
    %178 = vector.broadcast %177 : f32 to vector<1x256xf32>
    %cst_76 = arith.constant 0.000000e+00 : f32
    %179 = vector.broadcast %cst_76 : f32 to vector<1x256xf32>
    %c0_77 = arith.constant 0 : index
    %180 = memref.load %arg1[%c0_77] : memref<98xf32, #tpu.memory_space<smem>>
    %181 = vector.broadcast %180 : f32 to vector<1x256xf32>
    %182 = arith.mulf %181, %22 : vector<1x256xf32>
    %183 = arith.addf %179, %182 : vector<1x256xf32>
    %c1 = arith.constant 1 : index
    %184 = memref.load %arg1[%c1] : memref<98xf32, #tpu.memory_space<smem>>
    %185 = vector.broadcast %184 : f32 to vector<1x256xf32>
    %186 = arith.mulf %185, %34 : vector<1x256xf32>
    %187 = arith.addf %183, %186 : vector<1x256xf32>
    %c2 = arith.constant 2 : index
    %188 = memref.load %arg1[%c2] : memref<98xf32, #tpu.memory_space<smem>>
    %189 = vector.broadcast %188 : f32 to vector<1x256xf32>
    %190 = arith.mulf %189, %46 : vector<1x256xf32>
    %191 = arith.addf %187, %190 : vector<1x256xf32>
    %c3 = arith.constant 3 : index
    %192 = memref.load %arg1[%c3] : memref<98xf32, #tpu.memory_space<smem>>
    %193 = vector.broadcast %192 : f32 to vector<1x256xf32>
    %194 = arith.mulf %193, %57 : vector<1x256xf32>
    %195 = arith.addf %191, %194 : vector<1x256xf32>
    %c4 = arith.constant 4 : index
    %196 = memref.load %arg1[%c4] : memref<98xf32, #tpu.memory_space<smem>>
    %197 = vector.broadcast %196 : f32 to vector<1x256xf32>
    %198 = arith.mulf %197, %69 : vector<1x256xf32>
    %199 = arith.addf %195, %198 : vector<1x256xf32>
    %c5 = arith.constant 5 : index
    %200 = memref.load %arg1[%c5] : memref<98xf32, #tpu.memory_space<smem>>
    %201 = vector.broadcast %200 : f32 to vector<1x256xf32>
    %202 = arith.mulf %201, %81 : vector<1x256xf32>
    %203 = arith.addf %199, %202 : vector<1x256xf32>
    %c6 = arith.constant 6 : index
    %204 = memref.load %arg1[%c6] : memref<98xf32, #tpu.memory_space<smem>>
    %205 = vector.broadcast %204 : f32 to vector<1x256xf32>
    %206 = arith.mulf %205, %93 : vector<1x256xf32>
    %207 = arith.addf %203, %206 : vector<1x256xf32>
    %c49 = arith.constant 49 : index
    %208 = memref.load %arg1[%c49] : memref<98xf32, #tpu.memory_space<smem>>
    %209 = vector.broadcast %208 : f32 to vector<1x256xf32>
    %210 = arith.mulf %209, %105 : vector<1x256xf32>
    %211 = arith.addf %207, %210 : vector<1x256xf32>
    %c50 = arith.constant 50 : index
    %212 = memref.load %arg1[%c50] : memref<98xf32, #tpu.memory_space<smem>>
    %213 = vector.broadcast %212 : f32 to vector<1x256xf32>
    %214 = arith.mulf %213, %117 : vector<1x256xf32>
    %215 = arith.addf %211, %214 : vector<1x256xf32>
    %c51 = arith.constant 51 : index
    %216 = memref.load %arg1[%c51] : memref<98xf32, #tpu.memory_space<smem>>
    %217 = vector.broadcast %216 : f32 to vector<1x256xf32>
    %218 = arith.mulf %217, %129 : vector<1x256xf32>
    %219 = arith.addf %215, %218 : vector<1x256xf32>
    %c52 = arith.constant 52 : index
    %220 = memref.load %arg1[%c52] : memref<98xf32, #tpu.memory_space<smem>>
    %221 = vector.broadcast %220 : f32 to vector<1x256xf32>
    %222 = arith.mulf %221, %140 : vector<1x256xf32>
    %223 = arith.addf %219, %222 : vector<1x256xf32>
    %c53 = arith.constant 53 : index
    %224 = memref.load %arg1[%c53] : memref<98xf32, #tpu.memory_space<smem>>
    %225 = vector.broadcast %224 : f32 to vector<1x256xf32>
    %226 = arith.mulf %225, %152 : vector<1x256xf32>
    %227 = arith.addf %223, %226 : vector<1x256xf32>
    %c54 = arith.constant 54 : index
    %228 = memref.load %arg1[%c54] : memref<98xf32, #tpu.memory_space<smem>>
    %229 = vector.broadcast %228 : f32 to vector<1x256xf32>
    %230 = arith.mulf %229, %164 : vector<1x256xf32>
    %231 = arith.addf %227, %230 : vector<1x256xf32>
    %c55 = arith.constant 55 : index
    %232 = memref.load %arg1[%c55] : memref<98xf32, #tpu.memory_space<smem>>
    %233 = vector.broadcast %232 : f32 to vector<1x256xf32>
    %234 = arith.mulf %233, %176 : vector<1x256xf32>
    %235 = arith.addf %231, %234 : vector<1x256xf32>
    %c48_i32 = arith.constant 48 : i32
    %236 = tpu.dynamic_rotate %235 by %c48_i32 dim 1 : vector<1x256xf32>, i32 -> vector<1x256xf32>
    %c-48_i32 = arith.constant -48 : i32
    %237 = vector.broadcast %c-48_i32 : i32 to vector<1x256xi32>
    %238 = arith.addi %8, %237 : vector<1x256xi32>
    %c0_i32_78 = arith.constant 0 : i32
    %239 = vector.broadcast %c0_i32_78 : i32 to vector<1x256xi32>
    %240 = arith.cmpi sge, %238, %239 : vector<1x256xi32>
    %c-48_i32_79 = arith.constant -48 : i32
    %241 = vector.broadcast %c-48_i32_79 : i32 to vector<1x256xi32>
    %242 = arith.addi %8, %241 : vector<1x256xi32>
    %c256_i32 = arith.constant 256 : i32
    %243 = vector.broadcast %c256_i32 : i32 to vector<1x256xi32>
    %244 = arith.cmpi slt, %242, %243 : vector<1x256xi32>
    %245 = arith.andi %240, %244 : vector<1x256xi1>
    %cst_80 = arith.constant 0.000000e+00 : f32
    %246 = vector.broadcast %cst_80 : f32 to vector<1x256xf32>
    %247 = arith.select %245, %236, %246 : vector<1x256xi1>, vector<1x256xf32>
    %248 = arith.addf %178, %247 : vector<1x256xf32>
    %cst_81 = arith.constant 0.000000e+00 : f32
    %249 = vector.broadcast %cst_81 : f32 to vector<1x256xf32>
    %c7 = arith.constant 7 : index
    %250 = memref.load %arg1[%c7] : memref<98xf32, #tpu.memory_space<smem>>
    %251 = vector.broadcast %250 : f32 to vector<1x256xf32>
    %252 = arith.mulf %251, %22 : vector<1x256xf32>
    %253 = arith.addf %249, %252 : vector<1x256xf32>
    %c8 = arith.constant 8 : index
    %254 = memref.load %arg1[%c8] : memref<98xf32, #tpu.memory_space<smem>>
    %255 = vector.broadcast %254 : f32 to vector<1x256xf32>
    %256 = arith.mulf %255, %34 : vector<1x256xf32>
    %257 = arith.addf %253, %256 : vector<1x256xf32>
    %c9 = arith.constant 9 : index
    %258 = memref.load %arg1[%c9] : memref<98xf32, #tpu.memory_space<smem>>
    %259 = vector.broadcast %258 : f32 to vector<1x256xf32>
    %260 = arith.mulf %259, %46 : vector<1x256xf32>
    %261 = arith.addf %257, %260 : vector<1x256xf32>
    %c10 = arith.constant 10 : index
    %262 = memref.load %arg1[%c10] : memref<98xf32, #tpu.memory_space<smem>>
    %263 = vector.broadcast %262 : f32 to vector<1x256xf32>
    %264 = arith.mulf %263, %57 : vector<1x256xf32>
    %265 = arith.addf %261, %264 : vector<1x256xf32>
    %c11 = arith.constant 11 : index
    %266 = memref.load %arg1[%c11] : memref<98xf32, #tpu.memory_space<smem>>
    %267 = vector.broadcast %266 : f32 to vector<1x256xf32>
    %268 = arith.mulf %267, %69 : vector<1x256xf32>
    %269 = arith.addf %265, %268 : vector<1x256xf32>
    %c12 = arith.constant 12 : index
    %270 = memref.load %arg1[%c12] : memref<98xf32, #tpu.memory_space<smem>>
    %271 = vector.broadcast %270 : f32 to vector<1x256xf32>
    %272 = arith.mulf %271, %81 : vector<1x256xf32>
    %273 = arith.addf %269, %272 : vector<1x256xf32>
    %c13 = arith.constant 13 : index
    %274 = memref.load %arg1[%c13] : memref<98xf32, #tpu.memory_space<smem>>
    %275 = vector.broadcast %274 : f32 to vector<1x256xf32>
    %276 = arith.mulf %275, %93 : vector<1x256xf32>
    %277 = arith.addf %273, %276 : vector<1x256xf32>
    %c56 = arith.constant 56 : index
    %278 = memref.load %arg1[%c56] : memref<98xf32, #tpu.memory_space<smem>>
    %279 = vector.broadcast %278 : f32 to vector<1x256xf32>
    %280 = arith.mulf %279, %105 : vector<1x256xf32>
    %281 = arith.addf %277, %280 : vector<1x256xf32>
    %c57 = arith.constant 57 : index
    %282 = memref.load %arg1[%c57] : memref<98xf32, #tpu.memory_space<smem>>
    %283 = vector.broadcast %282 : f32 to vector<1x256xf32>
    %284 = arith.mulf %283, %117 : vector<1x256xf32>
    %285 = arith.addf %281, %284 : vector<1x256xf32>
    %c58 = arith.constant 58 : index
    %286 = memref.load %arg1[%c58] : memref<98xf32, #tpu.memory_space<smem>>
    %287 = vector.broadcast %286 : f32 to vector<1x256xf32>
    %288 = arith.mulf %287, %129 : vector<1x256xf32>
    %289 = arith.addf %285, %288 : vector<1x256xf32>
    %c59 = arith.constant 59 : index
    %290 = memref.load %arg1[%c59] : memref<98xf32, #tpu.memory_space<smem>>
    %291 = vector.broadcast %290 : f32 to vector<1x256xf32>
    %292 = arith.mulf %291, %140 : vector<1x256xf32>
    %293 = arith.addf %289, %292 : vector<1x256xf32>
    %c60 = arith.constant 60 : index
    %294 = memref.load %arg1[%c60] : memref<98xf32, #tpu.memory_space<smem>>
    %295 = vector.broadcast %294 : f32 to vector<1x256xf32>
    %296 = arith.mulf %295, %152 : vector<1x256xf32>
    %297 = arith.addf %293, %296 : vector<1x256xf32>
    %c61 = arith.constant 61 : index
    %298 = memref.load %arg1[%c61] : memref<98xf32, #tpu.memory_space<smem>>
    %299 = vector.broadcast %298 : f32 to vector<1x256xf32>
    %300 = arith.mulf %299, %164 : vector<1x256xf32>
    %301 = arith.addf %297, %300 : vector<1x256xf32>
    %c62 = arith.constant 62 : index
    %302 = memref.load %arg1[%c62] : memref<98xf32, #tpu.memory_space<smem>>
    %303 = vector.broadcast %302 : f32 to vector<1x256xf32>
    %304 = arith.mulf %303, %176 : vector<1x256xf32>
    %305 = arith.addf %301, %304 : vector<1x256xf32>
    %c32_i32 = arith.constant 32 : i32
    %306 = tpu.dynamic_rotate %305 by %c32_i32 dim 1 : vector<1x256xf32>, i32 -> vector<1x256xf32>
    %c-32_i32 = arith.constant -32 : i32
    %307 = vector.broadcast %c-32_i32 : i32 to vector<1x256xi32>
    %308 = arith.addi %8, %307 : vector<1x256xi32>
    %c0_i32_82 = arith.constant 0 : i32
    %309 = vector.broadcast %c0_i32_82 : i32 to vector<1x256xi32>
    %310 = arith.cmpi sge, %308, %309 : vector<1x256xi32>
    %c-32_i32_83 = arith.constant -32 : i32
    %311 = vector.broadcast %c-32_i32_83 : i32 to vector<1x256xi32>
    %312 = arith.addi %8, %311 : vector<1x256xi32>
    %c256_i32_84 = arith.constant 256 : i32
    %313 = vector.broadcast %c256_i32_84 : i32 to vector<1x256xi32>
    %314 = arith.cmpi slt, %312, %313 : vector<1x256xi32>
    %315 = arith.andi %310, %314 : vector<1x256xi1>
    %cst_85 = arith.constant 0.000000e+00 : f32
    %316 = vector.broadcast %cst_85 : f32 to vector<1x256xf32>
    %317 = arith.select %315, %306, %316 : vector<1x256xi1>, vector<1x256xf32>
    %318 = arith.addf %248, %317 : vector<1x256xf32>
    %cst_86 = arith.constant 0.000000e+00 : f32
    %319 = vector.broadcast %cst_86 : f32 to vector<1x256xf32>
    %c14 = arith.constant 14 : index
    %320 = memref.load %arg1[%c14] : memref<98xf32, #tpu.memory_space<smem>>
    %321 = vector.broadcast %320 : f32 to vector<1x256xf32>
    %322 = arith.mulf %321, %22 : vector<1x256xf32>
    %323 = arith.addf %319, %322 : vector<1x256xf32>
    %c15 = arith.constant 15 : index
    %324 = memref.load %arg1[%c15] : memref<98xf32, #tpu.memory_space<smem>>
    %325 = vector.broadcast %324 : f32 to vector<1x256xf32>
    %326 = arith.mulf %325, %34 : vector<1x256xf32>
    %327 = arith.addf %323, %326 : vector<1x256xf32>
    %c16 = arith.constant 16 : index
    %328 = memref.load %arg1[%c16] : memref<98xf32, #tpu.memory_space<smem>>
    %329 = vector.broadcast %328 : f32 to vector<1x256xf32>
    %330 = arith.mulf %329, %46 : vector<1x256xf32>
    %331 = arith.addf %327, %330 : vector<1x256xf32>
    %c17 = arith.constant 17 : index
    %332 = memref.load %arg1[%c17] : memref<98xf32, #tpu.memory_space<smem>>
    %333 = vector.broadcast %332 : f32 to vector<1x256xf32>
    %334 = arith.mulf %333, %57 : vector<1x256xf32>
    %335 = arith.addf %331, %334 : vector<1x256xf32>
    %c18 = arith.constant 18 : index
    %336 = memref.load %arg1[%c18] : memref<98xf32, #tpu.memory_space<smem>>
    %337 = vector.broadcast %336 : f32 to vector<1x256xf32>
    %338 = arith.mulf %337, %69 : vector<1x256xf32>
    %339 = arith.addf %335, %338 : vector<1x256xf32>
    %c19 = arith.constant 19 : index
    %340 = memref.load %arg1[%c19] : memref<98xf32, #tpu.memory_space<smem>>
    %341 = vector.broadcast %340 : f32 to vector<1x256xf32>
    %342 = arith.mulf %341, %81 : vector<1x256xf32>
    %343 = arith.addf %339, %342 : vector<1x256xf32>
    %c20 = arith.constant 20 : index
    %344 = memref.load %arg1[%c20] : memref<98xf32, #tpu.memory_space<smem>>
    %345 = vector.broadcast %344 : f32 to vector<1x256xf32>
    %346 = arith.mulf %345, %93 : vector<1x256xf32>
    %347 = arith.addf %343, %346 : vector<1x256xf32>
    %c63 = arith.constant 63 : index
    %348 = memref.load %arg1[%c63] : memref<98xf32, #tpu.memory_space<smem>>
    %349 = vector.broadcast %348 : f32 to vector<1x256xf32>
    %350 = arith.mulf %349, %105 : vector<1x256xf32>
    %351 = arith.addf %347, %350 : vector<1x256xf32>
    %c64 = arith.constant 64 : index
    %352 = memref.load %arg1[%c64] : memref<98xf32, #tpu.memory_space<smem>>
    %353 = vector.broadcast %352 : f32 to vector<1x256xf32>
    %354 = arith.mulf %353, %117 : vector<1x256xf32>
    %355 = arith.addf %351, %354 : vector<1x256xf32>
    %c65 = arith.constant 65 : index
    %356 = memref.load %arg1[%c65] : memref<98xf32, #tpu.memory_space<smem>>
    %357 = vector.broadcast %356 : f32 to vector<1x256xf32>
    %358 = arith.mulf %357, %129 : vector<1x256xf32>
    %359 = arith.addf %355, %358 : vector<1x256xf32>
    %c66 = arith.constant 66 : index
    %360 = memref.load %arg1[%c66] : memref<98xf32, #tpu.memory_space<smem>>
    %361 = vector.broadcast %360 : f32 to vector<1x256xf32>
    %362 = arith.mulf %361, %140 : vector<1x256xf32>
    %363 = arith.addf %359, %362 : vector<1x256xf32>
    %c67 = arith.constant 67 : index
    %364 = memref.load %arg1[%c67] : memref<98xf32, #tpu.memory_space<smem>>
    %365 = vector.broadcast %364 : f32 to vector<1x256xf32>
    %366 = arith.mulf %365, %152 : vector<1x256xf32>
    %367 = arith.addf %363, %366 : vector<1x256xf32>
    %c68 = arith.constant 68 : index
    %368 = memref.load %arg1[%c68] : memref<98xf32, #tpu.memory_space<smem>>
    %369 = vector.broadcast %368 : f32 to vector<1x256xf32>
    %370 = arith.mulf %369, %164 : vector<1x256xf32>
    %371 = arith.addf %367, %370 : vector<1x256xf32>
    %c69 = arith.constant 69 : index
    %372 = memref.load %arg1[%c69] : memref<98xf32, #tpu.memory_space<smem>>
    %373 = vector.broadcast %372 : f32 to vector<1x256xf32>
    %374 = arith.mulf %373, %176 : vector<1x256xf32>
    %375 = arith.addf %371, %374 : vector<1x256xf32>
    %c16_i32_87 = arith.constant 16 : i32
    %376 = tpu.dynamic_rotate %375 by %c16_i32_87 dim 1 : vector<1x256xf32>, i32 -> vector<1x256xf32>
    %c-16_i32 = arith.constant -16 : i32
    %377 = vector.broadcast %c-16_i32 : i32 to vector<1x256xi32>
    %378 = arith.addi %8, %377 : vector<1x256xi32>
    %c0_i32_88 = arith.constant 0 : i32
    %379 = vector.broadcast %c0_i32_88 : i32 to vector<1x256xi32>
    %380 = arith.cmpi sge, %378, %379 : vector<1x256xi32>
    %c-16_i32_89 = arith.constant -16 : i32
    %381 = vector.broadcast %c-16_i32_89 : i32 to vector<1x256xi32>
    %382 = arith.addi %8, %381 : vector<1x256xi32>
    %c256_i32_90 = arith.constant 256 : i32
    %383 = vector.broadcast %c256_i32_90 : i32 to vector<1x256xi32>
    %384 = arith.cmpi slt, %382, %383 : vector<1x256xi32>
    %385 = arith.andi %380, %384 : vector<1x256xi1>
    %cst_91 = arith.constant 0.000000e+00 : f32
    %386 = vector.broadcast %cst_91 : f32 to vector<1x256xf32>
    %387 = arith.select %385, %376, %386 : vector<1x256xi1>, vector<1x256xf32>
    %388 = arith.addf %318, %387 : vector<1x256xf32>
    %cst_92 = arith.constant 0.000000e+00 : f32
    %389 = vector.broadcast %cst_92 : f32 to vector<1x256xf32>
    %c21 = arith.constant 21 : index
    %390 = memref.load %arg1[%c21] : memref<98xf32, #tpu.memory_space<smem>>
    %391 = vector.broadcast %390 : f32 to vector<1x256xf32>
    %392 = arith.mulf %391, %22 : vector<1x256xf32>
    %393 = arith.addf %389, %392 : vector<1x256xf32>
    %c22 = arith.constant 22 : index
    %394 = memref.load %arg1[%c22] : memref<98xf32, #tpu.memory_space<smem>>
    %395 = vector.broadcast %394 : f32 to vector<1x256xf32>
    %396 = arith.mulf %395, %34 : vector<1x256xf32>
    %397 = arith.addf %393, %396 : vector<1x256xf32>
    %c23 = arith.constant 23 : index
    %398 = memref.load %arg1[%c23] : memref<98xf32, #tpu.memory_space<smem>>
    %399 = vector.broadcast %398 : f32 to vector<1x256xf32>
    %400 = arith.mulf %399, %46 : vector<1x256xf32>
    %401 = arith.addf %397, %400 : vector<1x256xf32>
    %c24 = arith.constant 24 : index
    %402 = memref.load %arg1[%c24] : memref<98xf32, #tpu.memory_space<smem>>
    %403 = vector.broadcast %402 : f32 to vector<1x256xf32>
    %404 = arith.mulf %403, %57 : vector<1x256xf32>
    %405 = arith.addf %401, %404 : vector<1x256xf32>
    %c25 = arith.constant 25 : index
    %406 = memref.load %arg1[%c25] : memref<98xf32, #tpu.memory_space<smem>>
    %407 = vector.broadcast %406 : f32 to vector<1x256xf32>
    %408 = arith.mulf %407, %69 : vector<1x256xf32>
    %409 = arith.addf %405, %408 : vector<1x256xf32>
    %c26 = arith.constant 26 : index
    %410 = memref.load %arg1[%c26] : memref<98xf32, #tpu.memory_space<smem>>
    %411 = vector.broadcast %410 : f32 to vector<1x256xf32>
    %412 = arith.mulf %411, %81 : vector<1x256xf32>
    %413 = arith.addf %409, %412 : vector<1x256xf32>
    %c27 = arith.constant 27 : index
    %414 = memref.load %arg1[%c27] : memref<98xf32, #tpu.memory_space<smem>>
    %415 = vector.broadcast %414 : f32 to vector<1x256xf32>
    %416 = arith.mulf %415, %93 : vector<1x256xf32>
    %417 = arith.addf %413, %416 : vector<1x256xf32>
    %c70 = arith.constant 70 : index
    %418 = memref.load %arg1[%c70] : memref<98xf32, #tpu.memory_space<smem>>
    %419 = vector.broadcast %418 : f32 to vector<1x256xf32>
    %420 = arith.mulf %419, %105 : vector<1x256xf32>
    %421 = arith.addf %417, %420 : vector<1x256xf32>
    %c71 = arith.constant 71 : index
    %422 = memref.load %arg1[%c71] : memref<98xf32, #tpu.memory_space<smem>>
    %423 = vector.broadcast %422 : f32 to vector<1x256xf32>
    %424 = arith.mulf %423, %117 : vector<1x256xf32>
    %425 = arith.addf %421, %424 : vector<1x256xf32>
    %c72 = arith.constant 72 : index
    %426 = memref.load %arg1[%c72] : memref<98xf32, #tpu.memory_space<smem>>
    %427 = vector.broadcast %426 : f32 to vector<1x256xf32>
    %428 = arith.mulf %427, %129 : vector<1x256xf32>
    %429 = arith.addf %425, %428 : vector<1x256xf32>
    %c73 = arith.constant 73 : index
    %430 = memref.load %arg1[%c73] : memref<98xf32, #tpu.memory_space<smem>>
    %431 = vector.broadcast %430 : f32 to vector<1x256xf32>
    %432 = arith.mulf %431, %140 : vector<1x256xf32>
    %433 = arith.addf %429, %432 : vector<1x256xf32>
    %c74 = arith.constant 74 : index
    %434 = memref.load %arg1[%c74] : memref<98xf32, #tpu.memory_space<smem>>
    %435 = vector.broadcast %434 : f32 to vector<1x256xf32>
    %436 = arith.mulf %435, %152 : vector<1x256xf32>
    %437 = arith.addf %433, %436 : vector<1x256xf32>
    %c75 = arith.constant 75 : index
    %438 = memref.load %arg1[%c75] : memref<98xf32, #tpu.memory_space<smem>>
    %439 = vector.broadcast %438 : f32 to vector<1x256xf32>
    %440 = arith.mulf %439, %164 : vector<1x256xf32>
    %441 = arith.addf %437, %440 : vector<1x256xf32>
    %c76 = arith.constant 76 : index
    %442 = memref.load %arg1[%c76] : memref<98xf32, #tpu.memory_space<smem>>
    %443 = vector.broadcast %442 : f32 to vector<1x256xf32>
    %444 = arith.mulf %443, %176 : vector<1x256xf32>
    %445 = arith.addf %441, %444 : vector<1x256xf32>
    %c0_i32_93 = arith.constant 0 : i32
    %446 = vector.broadcast %c0_i32_93 : i32 to vector<1x256xi32>
    %447 = arith.addi %8, %446 : vector<1x256xi32>
    %c0_i32_94 = arith.constant 0 : i32
    %448 = vector.broadcast %c0_i32_94 : i32 to vector<1x256xi32>
    %449 = arith.cmpi sge, %447, %448 : vector<1x256xi32>
    %c0_i32_95 = arith.constant 0 : i32
    %450 = vector.broadcast %c0_i32_95 : i32 to vector<1x256xi32>
    %451 = arith.addi %8, %450 : vector<1x256xi32>
    %c256_i32_96 = arith.constant 256 : i32
    %452 = vector.broadcast %c256_i32_96 : i32 to vector<1x256xi32>
    %453 = arith.cmpi slt, %451, %452 : vector<1x256xi32>
    %454 = arith.andi %449, %453 : vector<1x256xi1>
    %cst_97 = arith.constant 0.000000e+00 : f32
    %455 = vector.broadcast %cst_97 : f32 to vector<1x256xf32>
    %456 = arith.select %454, %445, %455 : vector<1x256xi1>, vector<1x256xf32>
    %457 = arith.addf %388, %456 : vector<1x256xf32>
    %cst_98 = arith.constant 0.000000e+00 : f32
    %458 = vector.broadcast %cst_98 : f32 to vector<1x256xf32>
    %c28 = arith.constant 28 : index
    %459 = memref.load %arg1[%c28] : memref<98xf32, #tpu.memory_space<smem>>
    %460 = vector.broadcast %459 : f32 to vector<1x256xf32>
    %461 = arith.mulf %460, %22 : vector<1x256xf32>
    %462 = arith.addf %458, %461 : vector<1x256xf32>
    %c29 = arith.constant 29 : index
    %463 = memref.load %arg1[%c29] : memref<98xf32, #tpu.memory_space<smem>>
    %464 = vector.broadcast %463 : f32 to vector<1x256xf32>
    %465 = arith.mulf %464, %34 : vector<1x256xf32>
    %466 = arith.addf %462, %465 : vector<1x256xf32>
    %c30 = arith.constant 30 : index
    %467 = memref.load %arg1[%c30] : memref<98xf32, #tpu.memory_space<smem>>
    %468 = vector.broadcast %467 : f32 to vector<1x256xf32>
    %469 = arith.mulf %468, %46 : vector<1x256xf32>
    %470 = arith.addf %466, %469 : vector<1x256xf32>
    %c31 = arith.constant 31 : index
    %471 = memref.load %arg1[%c31] : memref<98xf32, #tpu.memory_space<smem>>
    %472 = vector.broadcast %471 : f32 to vector<1x256xf32>
    %473 = arith.mulf %472, %57 : vector<1x256xf32>
    %474 = arith.addf %470, %473 : vector<1x256xf32>
    %c32 = arith.constant 32 : index
    %475 = memref.load %arg1[%c32] : memref<98xf32, #tpu.memory_space<smem>>
    %476 = vector.broadcast %475 : f32 to vector<1x256xf32>
    %477 = arith.mulf %476, %69 : vector<1x256xf32>
    %478 = arith.addf %474, %477 : vector<1x256xf32>
    %c33 = arith.constant 33 : index
    %479 = memref.load %arg1[%c33] : memref<98xf32, #tpu.memory_space<smem>>
    %480 = vector.broadcast %479 : f32 to vector<1x256xf32>
    %481 = arith.mulf %480, %81 : vector<1x256xf32>
    %482 = arith.addf %478, %481 : vector<1x256xf32>
    %c34 = arith.constant 34 : index
    %483 = memref.load %arg1[%c34] : memref<98xf32, #tpu.memory_space<smem>>
    %484 = vector.broadcast %483 : f32 to vector<1x256xf32>
    %485 = arith.mulf %484, %93 : vector<1x256xf32>
    %486 = arith.addf %482, %485 : vector<1x256xf32>
    %c77 = arith.constant 77 : index
    %487 = memref.load %arg1[%c77] : memref<98xf32, #tpu.memory_space<smem>>
    %488 = vector.broadcast %487 : f32 to vector<1x256xf32>
    %489 = arith.mulf %488, %105 : vector<1x256xf32>
    %490 = arith.addf %486, %489 : vector<1x256xf32>
    %c78 = arith.constant 78 : index
    %491 = memref.load %arg1[%c78] : memref<98xf32, #tpu.memory_space<smem>>
    %492 = vector.broadcast %491 : f32 to vector<1x256xf32>
    %493 = arith.mulf %492, %117 : vector<1x256xf32>
    %494 = arith.addf %490, %493 : vector<1x256xf32>
    %c79 = arith.constant 79 : index
    %495 = memref.load %arg1[%c79] : memref<98xf32, #tpu.memory_space<smem>>
    %496 = vector.broadcast %495 : f32 to vector<1x256xf32>
    %497 = arith.mulf %496, %129 : vector<1x256xf32>
    %498 = arith.addf %494, %497 : vector<1x256xf32>
    %c80 = arith.constant 80 : index
    %499 = memref.load %arg1[%c80] : memref<98xf32, #tpu.memory_space<smem>>
    %500 = vector.broadcast %499 : f32 to vector<1x256xf32>
    %501 = arith.mulf %500, %140 : vector<1x256xf32>
    %502 = arith.addf %498, %501 : vector<1x256xf32>
    %c81 = arith.constant 81 : index
    %503 = memref.load %arg1[%c81] : memref<98xf32, #tpu.memory_space<smem>>
    %504 = vector.broadcast %503 : f32 to vector<1x256xf32>
    %505 = arith.mulf %504, %152 : vector<1x256xf32>
    %506 = arith.addf %502, %505 : vector<1x256xf32>
    %c82 = arith.constant 82 : index
    %507 = memref.load %arg1[%c82] : memref<98xf32, #tpu.memory_space<smem>>
    %508 = vector.broadcast %507 : f32 to vector<1x256xf32>
    %509 = arith.mulf %508, %164 : vector<1x256xf32>
    %510 = arith.addf %506, %509 : vector<1x256xf32>
    %c83 = arith.constant 83 : index
    %511 = memref.load %arg1[%c83] : memref<98xf32, #tpu.memory_space<smem>>
    %512 = vector.broadcast %511 : f32 to vector<1x256xf32>
    %513 = arith.mulf %512, %176 : vector<1x256xf32>
    %514 = arith.addf %510, %513 : vector<1x256xf32>
    %c240_i32 = arith.constant 240 : i32
    %515 = tpu.dynamic_rotate %514 by %c240_i32 dim 1 : vector<1x256xf32>, i32 -> vector<1x256xf32>
    %c16_i32_99 = arith.constant 16 : i32
    %516 = vector.broadcast %c16_i32_99 : i32 to vector<1x256xi32>
    %517 = arith.addi %8, %516 : vector<1x256xi32>
    %c0_i32_100 = arith.constant 0 : i32
    %518 = vector.broadcast %c0_i32_100 : i32 to vector<1x256xi32>
    %519 = arith.cmpi sge, %517, %518 : vector<1x256xi32>
    %c16_i32_101 = arith.constant 16 : i32
    %520 = vector.broadcast %c16_i32_101 : i32 to vector<1x256xi32>
    %521 = arith.addi %8, %520 : vector<1x256xi32>
    %c256_i32_102 = arith.constant 256 : i32
    %522 = vector.broadcast %c256_i32_102 : i32 to vector<1x256xi32>
    %523 = arith.cmpi slt, %521, %522 : vector<1x256xi32>
    %524 = arith.andi %519, %523 : vector<1x256xi1>
    %cst_103 = arith.constant 0.000000e+00 : f32
    %525 = vector.broadcast %cst_103 : f32 to vector<1x256xf32>
    %526 = arith.select %524, %515, %525 : vector<1x256xi1>, vector<1x256xf32>
    %527 = arith.addf %457, %526 : vector<1x256xf32>
    %cst_104 = arith.constant 0.000000e+00 : f32
    %528 = vector.broadcast %cst_104 : f32 to vector<1x256xf32>
    %c35 = arith.constant 35 : index
    %529 = memref.load %arg1[%c35] : memref<98xf32, #tpu.memory_space<smem>>
    %530 = vector.broadcast %529 : f32 to vector<1x256xf32>
    %531 = arith.mulf %530, %22 : vector<1x256xf32>
    %532 = arith.addf %528, %531 : vector<1x256xf32>
    %c36 = arith.constant 36 : index
    %533 = memref.load %arg1[%c36] : memref<98xf32, #tpu.memory_space<smem>>
    %534 = vector.broadcast %533 : f32 to vector<1x256xf32>
    %535 = arith.mulf %534, %34 : vector<1x256xf32>
    %536 = arith.addf %532, %535 : vector<1x256xf32>
    %c37 = arith.constant 37 : index
    %537 = memref.load %arg1[%c37] : memref<98xf32, #tpu.memory_space<smem>>
    %538 = vector.broadcast %537 : f32 to vector<1x256xf32>
    %539 = arith.mulf %538, %46 : vector<1x256xf32>
    %540 = arith.addf %536, %539 : vector<1x256xf32>
    %c38 = arith.constant 38 : index
    %541 = memref.load %arg1[%c38] : memref<98xf32, #tpu.memory_space<smem>>
    %542 = vector.broadcast %541 : f32 to vector<1x256xf32>
    %543 = arith.mulf %542, %57 : vector<1x256xf32>
    %544 = arith.addf %540, %543 : vector<1x256xf32>
    %c39 = arith.constant 39 : index
    %545 = memref.load %arg1[%c39] : memref<98xf32, #tpu.memory_space<smem>>
    %546 = vector.broadcast %545 : f32 to vector<1x256xf32>
    %547 = arith.mulf %546, %69 : vector<1x256xf32>
    %548 = arith.addf %544, %547 : vector<1x256xf32>
    %c40 = arith.constant 40 : index
    %549 = memref.load %arg1[%c40] : memref<98xf32, #tpu.memory_space<smem>>
    %550 = vector.broadcast %549 : f32 to vector<1x256xf32>
    %551 = arith.mulf %550, %81 : vector<1x256xf32>
    %552 = arith.addf %548, %551 : vector<1x256xf32>
    %c41 = arith.constant 41 : index
    %553 = memref.load %arg1[%c41] : memref<98xf32, #tpu.memory_space<smem>>
    %554 = vector.broadcast %553 : f32 to vector<1x256xf32>
    %555 = arith.mulf %554, %93 : vector<1x256xf32>
    %556 = arith.addf %552, %555 : vector<1x256xf32>
    %c84 = arith.constant 84 : index
    %557 = memref.load %arg1[%c84] : memref<98xf32, #tpu.memory_space<smem>>
    %558 = vector.broadcast %557 : f32 to vector<1x256xf32>
    %559 = arith.mulf %558, %105 : vector<1x256xf32>
    %560 = arith.addf %556, %559 : vector<1x256xf32>
    %c85 = arith.constant 85 : index
    %561 = memref.load %arg1[%c85] : memref<98xf32, #tpu.memory_space<smem>>
    %562 = vector.broadcast %561 : f32 to vector<1x256xf32>
    %563 = arith.mulf %562, %117 : vector<1x256xf32>
    %564 = arith.addf %560, %563 : vector<1x256xf32>
    %c86 = arith.constant 86 : index
    %565 = memref.load %arg1[%c86] : memref<98xf32, #tpu.memory_space<smem>>
    %566 = vector.broadcast %565 : f32 to vector<1x256xf32>
    %567 = arith.mulf %566, %129 : vector<1x256xf32>
    %568 = arith.addf %564, %567 : vector<1x256xf32>
    %c87 = arith.constant 87 : index
    %569 = memref.load %arg1[%c87] : memref<98xf32, #tpu.memory_space<smem>>
    %570 = vector.broadcast %569 : f32 to vector<1x256xf32>
    %571 = arith.mulf %570, %140 : vector<1x256xf32>
    %572 = arith.addf %568, %571 : vector<1x256xf32>
    %c88 = arith.constant 88 : index
    %573 = memref.load %arg1[%c88] : memref<98xf32, #tpu.memory_space<smem>>
    %574 = vector.broadcast %573 : f32 to vector<1x256xf32>
    %575 = arith.mulf %574, %152 : vector<1x256xf32>
    %576 = arith.addf %572, %575 : vector<1x256xf32>
    %c89 = arith.constant 89 : index
    %577 = memref.load %arg1[%c89] : memref<98xf32, #tpu.memory_space<smem>>
    %578 = vector.broadcast %577 : f32 to vector<1x256xf32>
    %579 = arith.mulf %578, %164 : vector<1x256xf32>
    %580 = arith.addf %576, %579 : vector<1x256xf32>
    %c90 = arith.constant 90 : index
    %581 = memref.load %arg1[%c90] : memref<98xf32, #tpu.memory_space<smem>>
    %582 = vector.broadcast %581 : f32 to vector<1x256xf32>
    %583 = arith.mulf %582, %176 : vector<1x256xf32>
    %584 = arith.addf %580, %583 : vector<1x256xf32>
    %c224_i32 = arith.constant 224 : i32
    %585 = tpu.dynamic_rotate %584 by %c224_i32 dim 1 : vector<1x256xf32>, i32 -> vector<1x256xf32>
    %c32_i32_105 = arith.constant 32 : i32
    %586 = vector.broadcast %c32_i32_105 : i32 to vector<1x256xi32>
    %587 = arith.addi %8, %586 : vector<1x256xi32>
    %c0_i32_106 = arith.constant 0 : i32
    %588 = vector.broadcast %c0_i32_106 : i32 to vector<1x256xi32>
    %589 = arith.cmpi sge, %587, %588 : vector<1x256xi32>
    %c32_i32_107 = arith.constant 32 : i32
    %590 = vector.broadcast %c32_i32_107 : i32 to vector<1x256xi32>
    %591 = arith.addi %8, %590 : vector<1x256xi32>
    %c256_i32_108 = arith.constant 256 : i32
    %592 = vector.broadcast %c256_i32_108 : i32 to vector<1x256xi32>
    %593 = arith.cmpi slt, %591, %592 : vector<1x256xi32>
    %594 = arith.andi %589, %593 : vector<1x256xi1>
    %cst_109 = arith.constant 0.000000e+00 : f32
    %595 = vector.broadcast %cst_109 : f32 to vector<1x256xf32>
    %596 = arith.select %594, %585, %595 : vector<1x256xi1>, vector<1x256xf32>
    %597 = arith.addf %527, %596 : vector<1x256xf32>
    %cst_110 = arith.constant 0.000000e+00 : f32
    %598 = vector.broadcast %cst_110 : f32 to vector<1x256xf32>
    %c42 = arith.constant 42 : index
    %599 = memref.load %arg1[%c42] : memref<98xf32, #tpu.memory_space<smem>>
    %600 = vector.broadcast %599 : f32 to vector<1x256xf32>
    %601 = arith.mulf %600, %22 : vector<1x256xf32>
    %602 = arith.addf %598, %601 : vector<1x256xf32>
    %c43 = arith.constant 43 : index
    %603 = memref.load %arg1[%c43] : memref<98xf32, #tpu.memory_space<smem>>
    %604 = vector.broadcast %603 : f32 to vector<1x256xf32>
    %605 = arith.mulf %604, %34 : vector<1x256xf32>
    %606 = arith.addf %602, %605 : vector<1x256xf32>
    %c44 = arith.constant 44 : index
    %607 = memref.load %arg1[%c44] : memref<98xf32, #tpu.memory_space<smem>>
    %608 = vector.broadcast %607 : f32 to vector<1x256xf32>
    %609 = arith.mulf %608, %46 : vector<1x256xf32>
    %610 = arith.addf %606, %609 : vector<1x256xf32>
    %c45 = arith.constant 45 : index
    %611 = memref.load %arg1[%c45] : memref<98xf32, #tpu.memory_space<smem>>
    %612 = vector.broadcast %611 : f32 to vector<1x256xf32>
    %613 = arith.mulf %612, %57 : vector<1x256xf32>
    %614 = arith.addf %610, %613 : vector<1x256xf32>
    %c46 = arith.constant 46 : index
    %615 = memref.load %arg1[%c46] : memref<98xf32, #tpu.memory_space<smem>>
    %616 = vector.broadcast %615 : f32 to vector<1x256xf32>
    %617 = arith.mulf %616, %69 : vector<1x256xf32>
    %618 = arith.addf %614, %617 : vector<1x256xf32>
    %c47 = arith.constant 47 : index
    %619 = memref.load %arg1[%c47] : memref<98xf32, #tpu.memory_space<smem>>
    %620 = vector.broadcast %619 : f32 to vector<1x256xf32>
    %621 = arith.mulf %620, %81 : vector<1x256xf32>
    %622 = arith.addf %618, %621 : vector<1x256xf32>
    %c48 = arith.constant 48 : index
    %623 = memref.load %arg1[%c48] : memref<98xf32, #tpu.memory_space<smem>>
    %624 = vector.broadcast %623 : f32 to vector<1x256xf32>
    %625 = arith.mulf %624, %93 : vector<1x256xf32>
    %626 = arith.addf %622, %625 : vector<1x256xf32>
    %c91 = arith.constant 91 : index
    %627 = memref.load %arg1[%c91] : memref<98xf32, #tpu.memory_space<smem>>
    %628 = vector.broadcast %627 : f32 to vector<1x256xf32>
    %629 = arith.mulf %628, %105 : vector<1x256xf32>
    %630 = arith.addf %626, %629 : vector<1x256xf32>
    %c92 = arith.constant 92 : index
    %631 = memref.load %arg1[%c92] : memref<98xf32, #tpu.memory_space<smem>>
    %632 = vector.broadcast %631 : f32 to vector<1x256xf32>
    %633 = arith.mulf %632, %117 : vector<1x256xf32>
    %634 = arith.addf %630, %633 : vector<1x256xf32>
    %c93 = arith.constant 93 : index
    %635 = memref.load %arg1[%c93] : memref<98xf32, #tpu.memory_space<smem>>
    %636 = vector.broadcast %635 : f32 to vector<1x256xf32>
    %637 = arith.mulf %636, %129 : vector<1x256xf32>
    %638 = arith.addf %634, %637 : vector<1x256xf32>
    %c94 = arith.constant 94 : index
    %639 = memref.load %arg1[%c94] : memref<98xf32, #tpu.memory_space<smem>>
    %640 = vector.broadcast %639 : f32 to vector<1x256xf32>
    %641 = arith.mulf %640, %140 : vector<1x256xf32>
    %642 = arith.addf %638, %641 : vector<1x256xf32>
    %c95 = arith.constant 95 : index
    %643 = memref.load %arg1[%c95] : memref<98xf32, #tpu.memory_space<smem>>
    %644 = vector.broadcast %643 : f32 to vector<1x256xf32>
    %645 = arith.mulf %644, %152 : vector<1x256xf32>
    %646 = arith.addf %642, %645 : vector<1x256xf32>
    %c96 = arith.constant 96 : index
    %647 = memref.load %arg1[%c96] : memref<98xf32, #tpu.memory_space<smem>>
    %648 = vector.broadcast %647 : f32 to vector<1x256xf32>
    %649 = arith.mulf %648, %164 : vector<1x256xf32>
    %650 = arith.addf %646, %649 : vector<1x256xf32>
    %c97 = arith.constant 97 : index
    %651 = memref.load %arg1[%c97] : memref<98xf32, #tpu.memory_space<smem>>
    %652 = vector.broadcast %651 : f32 to vector<1x256xf32>
    %653 = arith.mulf %652, %176 : vector<1x256xf32>
    %654 = arith.addf %650, %653 : vector<1x256xf32>
    %c208_i32 = arith.constant 208 : i32
    %655 = tpu.dynamic_rotate %654 by %c208_i32 dim 1 : vector<1x256xf32>, i32 -> vector<1x256xf32>
    %c48_i32_111 = arith.constant 48 : i32
    %656 = vector.broadcast %c48_i32_111 : i32 to vector<1x256xi32>
    %657 = arith.addi %8, %656 : vector<1x256xi32>
    %c0_i32_112 = arith.constant 0 : i32
    %658 = vector.broadcast %c0_i32_112 : i32 to vector<1x256xi32>
    %659 = arith.cmpi sge, %657, %658 : vector<1x256xi32>
    %c48_i32_113 = arith.constant 48 : i32
    %660 = vector.broadcast %c48_i32_113 : i32 to vector<1x256xi32>
    %661 = arith.addi %8, %660 : vector<1x256xi32>
    %c256_i32_114 = arith.constant 256 : i32
    %662 = vector.broadcast %c256_i32_114 : i32 to vector<1x256xi32>
    %663 = arith.cmpi slt, %661, %662 : vector<1x256xi32>
    %664 = arith.andi %659, %663 : vector<1x256xi1>
    %cst_115 = arith.constant 0.000000e+00 : f32
    %665 = vector.broadcast %cst_115 : f32 to vector<1x256xf32>
    %666 = arith.select %664, %655, %665 : vector<1x256xi1>, vector<1x256xf32>
    %667 = arith.addf %597, %666 : vector<1x256xf32>
    %668 = arith.negf %667 : vector<1x256xf32>
    %669 = math.exp %668 : vector<1x256xf32>
    %cst_116 = arith.constant 1.000000e+00 : f32
    %670 = vector.broadcast %cst_116 : f32 to vector<1x256xf32>
    %671 = arith.addf %670, %669 : vector<1x256xf32>
    %672 = arith.divf %670, %671 : vector<1x256xf32>
    %673 = vector.broadcast %672 : vector<1x256xf32> to vector<4x256xf32>
    %674 = arith.mulf %1, %673 : vector<4x256xf32>
    %c0_117 = arith.constant 0 : index
    %c0_118 = arith.constant 0 : index
    %c0_119 = arith.constant 0 : index
    %675 = vector.load %arg4[%c0_117, %c0_118, %c0_119] : memref<1x4x256xf32, #tpu.memory_space<vmem>>, vector<1x4x256xf32>
    %676 = vector.shape_cast %675 : vector<1x4x256xf32> to vector<4x256xf32>
    %677 = vector.shape_cast %674 : vector<4x256xf32> to vector<1x4x256xf32>
    tpu.vector_store %arg4[%c0_117, %c0_118, %c0_119], %677 {strides = array<i32>} : memref<1x4x256xf32, #tpu.memory_space<vmem>>, vector<1x4x256xf32>,
    return
  }
  func.func @transform_0(%arg0: i32) -> i32 {
    %c0_i32 = arith.constant 0 : i32
    %c0_i32_0 = arith.constant 0 : i32
    return %c0_i32 : i32
  }
  func.func @transform_1(%arg0: i32) -> i32 {
    %c0_i32 = arith.constant 0 : i32
    %c0_i32_0 = arith.constant 0 : i32
    return %c0_i32 : i32
  }
  func.func @transform_2(%arg0: i32) -> (i32, i32, i32) {
    %c0_i32 = arith.constant 0 : i32
    %c0_i32_0 = arith.constant 0 : i32
    %c0_i32_1 = arith.constant 0 : i32
    return %arg0, %c0_i32, %c0_i32_0 : i32, i32, i32
  }
  func.func @transform_3(%arg0: i32) -> (i32, i32, i32) {
    %c0_i32 = arith.constant 0 : i32
    %c0_i32_0 = arith.constant 0 : i32
    %c0_i32_1 = arith.constant 0 : i32
    return %arg0, %c0_i32, %c0_i32_0 : i32, i32, i32
  }
}

</mosaic_0001>

<llo_original>
// kernel: tpu_custom_call.1
$region0: #{tpu_custom_call.1}
  #allocation0 [shape = 'u32[]', space=smem, size = 0x4, offset = 0x4, fixed_abs, tag = 'smem constant byte address 0x4 - core index']
  #allocation1 [shape = 'u32[144,128]{1,0:T(1,128)}', space=vmem, size = 0x12000, scoped, tag = 'internal scratch']
  #allocation2 [shape = 'f32[1]{0:T(128)S(6)}', space=smem, size = 0x200, scoped, tag = 'scoped memory for tpu_custom_call.1']
  %s0 = inlined_call_operand.vmem [shape: f32[98], index: 0, kind: input, shape index: {}]
  %s1 = inlined_call_operand.<no memory space> [shape: f32[1], index: 1, kind: input, shape index: {}]
  %s2 = inlined_call_operand.hbm [shape: f32[2,4,256], index: 2, kind: input, shape index: {}]
  %s3 = inlined_call_operand.hbm [shape: f32[2,4,256], index: 3, kind: output, shape index: {}]
  %s4 = sld [smem:[#allocation0]]
  $region53: #{tpu_custom_call.1} parent=0
    _
  %s6 = ssub.s32 1, %s4
  %s7 = scalar_select 0, %s6, %s4
  %8 = sst [smem:[#allocation2]] %s1
  $region1: #{tpu_custom_call.1} parent=0
    #allocation3 [shape = 'u8[512]{0}', space=smem, size = 0x200, scoped, tag = 'input window, operand 0, single buffered']
    #allocation4 [shape = 's32[2]{0}', space=sflag, size = 0x8, scoped, tag = 'scoped memory for tpu_custom_call.1']
    #allocation5 [shape = 's32[2]{0}', space=sflag, size = 0x8, scoped, tag = 'scoped memory for tpu_custom_call.1']
    #allocation6 [shape = 's32[2]{0}', space=sflag, size = 0x8, scoped, tag = 'scoped memory for tpu_custom_call.1']
    #allocation7 [shape = 'u8[8192]{0}', space=vmem, size = 0x2000, scoped, tag = 'input window, operand 2']
    #allocation8 [shape = 'u8[8192]{0}', space=vmem, size = 0x2000, scoped, tag = 'output window, operand 0']
    %9 = vsyncpa [#allocation6], 0
    %10 = vsyncpa [#allocation4], 0
    %s11 = scalar_lea.sflag [#allocation4], 1
    %12 = vsyncpa %s11, 0
    %13 = vsyncpa [#allocation5], 0
    %s14 = scalar_lea.sflag [#allocation5], 1
    %15 = vsyncpa %s14, 0
    loop: start=0, step=1, limit=4
    $region2: #{tpu_custom_call.1} parent=1 // loop_pre_header
      _
    $region3: #{tpu_custom_call.1} parent=1 // loop_header
      %s17 = sphi 0, %s21
      %p18 = scmp.ge.s32.totalorder %s17, 4
      %s25 = sphi 0, %s25
      %s27 = sphi 0, %s25
      %s28 = sphi 0, %s27
      %s42 = sphi 0, %s28
      %s46 = sphi 0, %s46
      %s48 = sphi 0, %s46
      %s49 = sphi 0, %s48
      %s63 = sphi 0, %s49
      %s69 = sphi 0, %s71
      %s72 = sphi 0, %s69
      %s73 = sphi 0, %s72
      %s89 = sphi 0, %s73
      %s95 = sphi 0, %s97
      %s98 = sphi 0, %s95
      %s99 = sphi 0, %s98
      %s115 = sphi 0, %s99
    $region4: #{tpu_custom_call.1} parent=1 // loop_header_branch
      %20 = sbr.rel (%p18) target = $region8
    $region5: #{tpu_custom_call.1} parent=1 // loop_body
      %s22 = ssub.s32 %s17, 1
      %s23 = ssub.s32 %s17, 2
      %s24 = sadd.s32 %s17, 1
      %s26 = sadd.s32 %s25, 1
      %p29 = scmp.eq.s32.totalorder %s17, 1
      %p30 = scmp.ne.s32.totalorder %s25, %s27
      %p31 = scmp.eq.s32.totalorder %s17, 0
      %p32 = por %p30, %p31
      %p33 = scmp.ne.s32.totalorder %s25, %s27
      %p34 = scmp.eq.s32.totalorder %s22, 1
      %p35 = por %p33, %p34
      %p36 = scmp.ne.s32.totalorder %s27, %s28
      %p37 = scmp.eq.s32.totalorder %s22, 0
      %p38 = por %p36, %p37
      %p39 = scmp.ne.s32.totalorder %s27, %s28
      %p40 = scmp.eq.s32.totalorder %s23, 1
      %p41 = por %p39, %p40
      %p43 = scmp.ne.s32.totalorder %s28, %s42
      %p44 = scmp.eq.s32.totalorder %s23, 0
      %p45 = por %p43, %p44
      %s47 = sadd.s32 %s46, 1
      %p50 = scmp.eq.s32.totalorder %s17, 1
      %p51 = scmp.ne.s32.totalorder %s46, %s48
      %p52 = scmp.eq.s32.totalorder %s17, 0
      %p53 = por %p51, %p52
      %p54 = scmp.ne.s32.totalorder %s46, %s48
      %p55 = scmp.eq.s32.totalorder %s22, 1
      %p56 = por %p54, %p55
      %p57 = scmp.ne.s32.totalorder %s48, %s49
      %p58 = scmp.eq.s32.totalorder %s22, 0
      %p59 = por %p57, %p58
      %p60 = scmp.ne.s32.totalorder %s48, %s49
      %p61 = scmp.eq.s32.totalorder %s23, 1
      %p62 = por %p60, %p61
      %p64 = scmp.ne.s32.totalorder %s49, %s63
      %p65 = scmp.eq.s32.totalorder %s23, 0
      %p66 = por %p64, %p65
      %s67 = ssub.s32 %s17, %s24
      %p68 = scmp.eq.s32.totalorder %s67, 0
      %s70 = sadd.s32 %s69, 1
      %s71 = scalar_select %p68, %s69, %s70
      %p74 = pneg %p68
      %p75 = scmp.eq.s32.totalorder %s17, 1
      %p76 = por %p74, %p75
      %p77 = scmp.ne.s32.totalorder %s69, %s72
      %p78 = scmp.eq.s32.totalorder %s17, 0
      %p79 = por %p77, %p78
      %p80 = scmp.ne.s32.totalorder %s69, %s72
      %p81 = scmp.eq.s32.totalorder %s22, 1
      %p82 = por %p80, %p81
      %p83 = scmp.ne.s32.totalorder %s72, %s73
      %p84 = scmp.eq.s32.totalorder %s22, 0
      %p85 = por %p83, %p84
      %p86 = scmp.ne.s32.totalorder %s72, %s73
      %p87 = scmp.eq.s32.totalorder %s23, 1
      %p88 = por %p86, %p87
      %p90 = scmp.ne.s32.totalorder %s73, %s89
      %p91 = scmp.eq.s32.totalorder %s23, 0
      %p92 = por %p90, %p91
      %s93 = ssub.s32 %s17, %s24
      %p94 = scmp.eq.s32.totalorder %s93, 0
      %s96 = sadd.s32 %s95, 1
      %s97 = scalar_select %p94, %s95, %s96
      %p100 = pneg %p94
      %p101 = scmp.eq.s32.totalorder %s17, 1
      %p102 = por %p100, %p101
      %p103 = scmp.ne.s32.totalorder %s95, %s98
      %p104 = scmp.eq.s32.totalorder %s17, 0
      %p105 = por %p103, %p104
      %p106 = scmp.ne.s32.totalorder %s95, %s98
      %p107 = scmp.eq.s32.totalorder %s22, 1
      %p108 = por %p106, %p107
      %p109 = scmp.ne.s32.totalorder %s98, %s99
      %p110 = scmp.eq.s32.totalorder %s22, 0
      %p111 = por %p109, %p110
      %p112 = scmp.ne.s32.totalorder %s98, %s99
      %p113 = scmp.eq.s32.totalorder %s23, 1
      %p114 = por %p112, %p113
      %p116 = scmp.ne.s32.totalorder %s99, %s115
      %p117 = scmp.eq.s32.totalorder %s23, 0
      %p118 = por %p116, %p117
      %p119 = scmp.le.s32.totalorder 1, %s17
      %p120 = scmp.lt.s32.totalorder %s17, 3
      %p121 = pnand %p119, %p120
      %p122 = pneg %p121
      // Predicated region
      $region9: #{tpu_custom_call.1} parent=5 // pred_check
        _
      $region10: #{tpu_custom_call.1} parent=5 // pred_check_branch
        %124 = sbr.rel (%p121) target = $region12
      $region11: #{tpu_custom_call.1} parent=5 // pred_region
        %s125 = ssub.s32 %s17, 1
        // Predicated region
        $region13: #{tpu_custom_call.1} parent=11 // pred_check
          %p126 = pneg %p38
        $region14: #{tpu_custom_call.1} parent=11 // pred_check_branch
          %128 = sbr.rel (%p126) target = $region16
        $region15: #{tpu_custom_call.1} parent=11 // pred_region
          %s130 = ssub.s32 16, 16
          %131 = vsyncadd [#allocation6], %s130
          %s133 = sshll.u32 %s0, 4
          %s134 = int_to_ptr.vmem [resolvable:$true] %s133
          %136 = dma.vmem_to_smem %s134, 16, [#allocation3], [#allocation6]
        $region16: #{tpu_custom_call.1} parent=11 // pred_fallthru
          _
        // Predicated region
        $region17: #{tpu_custom_call.1} parent=11 // pred_check
          %p137 = pneg %p59
        $region18: #{tpu_custom_call.1} parent=11 // pred_check_branch
          %139 = sbr.rel (%p137) target = $region20
        $region19: #{tpu_custom_call.1} parent=11 // pred_region
          _
        $region20: #{tpu_custom_call.1} parent=11 // pred_fallthru
          _
      $region12: #{tpu_custom_call.1} parent=5 // pred_fallthru
        _
      %p140 = scmp.lt.s32.totalorder %s17, 2
      // Predicated region
      $region21: #{tpu_custom_call.1} parent=5 // pred_check
        %p141 = pneg %p140
      $region22: #{tpu_custom_call.1} parent=5 // pred_check_branch
        %143 = sbr.rel (%p141) target = $region24
      $region23: #{tpu_custom_call.1} parent=5 // pred_region
        // Predicated region
        $region25: #{tpu_custom_call.1} parent=23 // pred_check
          %p144 = pneg %p79
        $region26: #{tpu_custom_call.1} parent=23 // pred_check_branch
          %146 = sbr.rel (%p144) target = $region28
        $region27: #{tpu_custom_call.1} parent=23 // pred_region
          %s147 = sand.u32 %s69, 1
          %s148 = scalar_lea.sflag [#allocation4], %s147
          %s149 = sand.u32 %s69, 1
          %s150 = smul.addr %s149, 8
          %s151 = scalar_lea.vmem [#allocation7], %s150
          %s153 = ssub.s32 128, 128
          %154 = vsyncadd %s148, %s153
          %s155 = smul.addr %s17, 2
          %s156 = smul.addr %s155, 64
          %s157 = scalar_lea.hbm %s2, %s156
          %s159 = sshll.u32 %s151, 4
          %s160 = int_to_ptr.vmem [resolvable:$true] %s159
          %162 = dma.hbm_to_vmem [thread:$0]  %s157, 128, %s160, %s148
        $region28: #{tpu_custom_call.1} parent=23 // pred_fallthru
          _
      $region24: #{tpu_custom_call.1} parent=5 // pred_fallthru
        _
      %p163 = scmp.le.s32.totalorder 1, %s17
      %p164 = scmp.lt.s32.totalorder %s17, 3
      %p165 = pnand %p163, %p164
      %p166 = pneg %p165
      // Predicated region
      $region29: #{tpu_custom_call.1} parent=5 // pred_check
        _
      $region30: #{tpu_custom_call.1} parent=5 // pred_check_branch
        %168 = sbr.rel (%p165) target = $region32
      $region31: #{tpu_custom_call.1} parent=5 // pred_region
        %s169 = ssub.s32 %s17, 1
        // Predicated region
        $region33: #{tpu_custom_call.1} parent=31 // pred_check
          %p170 = pneg %p38
        $region34: #{tpu_custom_call.1} parent=31 // pred_check_branch
          %172 = sbr.rel (%p170) target = $region36
        $region35: #{tpu_custom_call.1} parent=31 // pred_region
          %173 = dma.done [#allocation6], 16
        $region36: #{tpu_custom_call.1} parent=31 // pred_fallthru
          _
        %s174 = sand.u32 %s72, 1
        %s175 = scalar_lea.sflag [#allocation4], %s174
        %s176 = sand.u32 %s72, 1
        %s177 = smul.addr %s176, 8
        %s178 = scalar_lea.vmem [#allocation7], %s177
        // Predicated region
        $region37: #{tpu_custom_call.1} parent=31 // pred_check
          %p179 = pneg %p85
        $region38: #{tpu_custom_call.1} parent=31 // pred_check_branch
          %181 = sbr.rel (%p179) target = $region40
        $region39: #{tpu_custom_call.1} parent=31 // pred_region
          %182 = dma.done %s175, 128
        $region40: #{tpu_custom_call.1} parent=31 // pred_fallthru
          _
        %183 = sfence
        %p184 = pneg %p38
        %p185 = pneg %p35
        %p186 = pneg %p59
        %p187 = pneg %p56
        %s188 = sand.u32 %s72, 1
        %s189 = scalar_lea.sflag [#allocation4], %s188
        %s190 = sand.u32 %s72, 1
        %s191 = smul.addr %s190, 8
        %s192 = scalar_lea.vmem [#allocation7], %s191
        %p193 = pneg %p85
        %p194 = pneg %p82
        %p195 = pneg %p111
        %p196 = pneg %p108
        %s197 = sand.u32 %s98, 1
        %s198 = scalar_lea.sflag [#allocation5], %s197
        %s199 = sand.u32 %s98, 1
        %s200 = smul.addr %s199, 8
        %s201 = scalar_lea.vmem [#allocation8], %s200
        %v202 = vld [vmem:[%s178] sm:$0xff]
        %v204 = vcombine.high %v202, %v202
        %vm206 = vcmask 1043456
        %v207 = vsel %vm206, %v202, -inf
        %v208 = vrot.slane %v207, 4
        %v209 = vmax.f32 %v207, %v208
        %v210 = vrot.slane %v209, 2
        %v211 = vmax.f32 %v209, %v210
        %v212 = vrot.slane %v211, 1
        %v213 = vmax.f32 %v211, %v212
        %v214 = vsel %vm206, %v204, -inf
        %v215 = vrot.slane %v214, 4
        %v216 = vmax.f32 %v214, %v215
        %v217 = vrot.slane %v216, 2
        %v218 = vmax.f32 %v216, %v217
        %v219 = vrot.slane %v218, 1
        %v220 = vmax.f32 %v218, %v219
        %v221 = vsel %vm206, %v202, 0.0
        %v222 = vrot.slane %v221, 4
        %v223 = vadd.f32 %v221, %v222
        %v224 = vrot.slane %v223, 2
        %v225 = vadd.f32 %v223, %v224
        %v226 = vrot.slane %v225, 1
        %v227 = vadd.f32 %v225, %v226
        %v228 = vsel %vm206, %v204, 0.0
        %v229 = vrot.slane %v228, 4
        %v230 = vadd.f32 %v228, %v229
        %v231 = vrot.slane %v230, 2
        %v232 = vadd.f32 %v230, %v231
        %v233 = vrot.slane %v232, 1
        %v234 = vadd.f32 %v232, %v233
        %v235 = vmul.f32 %v227, 0.25
        %v236 = vmul.f32 %v234, 0.25
        %v237 = vlaneseq
        %v238 = vand.u32 %v237, 127
        %v239 = vadd.s32 %v238, 128
        %v240 = vand.u32 %v238, 15
        %v241 = vand.u32 %v239, 15
        %242 = vrot.lane.b32.xlu0 %v213, 3
        %v243 = vpop.permute.xlu0 %242
        %244 = vrot.lane.b32.xlu0 %v220, 3
        %v245 = vpop.permute.xlu0 %244
        %vm246 = vcmp.lt.s32.totalorder %v238, 3
        %v247 = vsel %vm246, %v243, %v245
        %v248 = vsel %vm246, %v245, %v243
        %v249 = vadd.s32 %v240, 4294967293
        %v250 = vadd.s32 %v241, 4294967293
        %vm251 = vcmp.ge.s32.totalorder %v249, 0
        %vm252 = vcmp.ge.s32.totalorder %v250, 0
        %vm253 = vcmp.lt.s32.totalorder %v249, 16
        %vm254 = vcmp.lt.s32.totalorder %v250, 16
        %vm255 = vmand %vm251, %vm253
        %vm256 = vmand %vm252, %vm254
        %v257 = vsel %vm255, %v248, 0.0
        %v258 = vsel %vm256, %v247, 0.0
        %259 = vrot.lane.b32.xlu0 %v213, 2
        %v260 = vpop.permute.xlu0 %259
        %261 = vrot.lane.b32.xlu0 %v220, 2
        %v262 = vpop.permute.xlu0 %261
        %vm263 = vcmp.lt.s32.totalorder %v238, 2
        %v264 = vsel %vm263, %v260, %v262
        %v265 = vsel %vm263, %v262, %v260
        %v266 = vadd.s32 %v240, 4294967294
        %v267 = vadd.s32 %v241, 4294967294
        %vm268 = vcmp.ge.s32.totalorder %v266, 0
        %vm269 = vcmp.ge.s32.totalorder %v267, 0
        %vm270 = vcmp.lt.s32.totalorder %v266, 16
        %vm271 = vcmp.lt.s32.totalorder %v267, 16
        %vm272 = vmand %vm268, %vm270
        %vm273 = vmand %vm269, %vm271
        %v274 = vsel %vm272, %v265, 0.0
        %v275 = vsel %vm273, %v264, 0.0
        %276 = vrot.lane.b32.xlu0 %v213, 1
        %v277 = vpop.permute.xlu0 %276
        %278 = vrot.lane.b32.xlu0 %v220, 1
        %v279 = vpop.permute.xlu0 %278
        %vm280 = vcmp.lt.s32.totalorder %v238, 1
        %v281 = vsel %vm280, %v277, %v279
        %v282 = vsel %vm280, %v279, %v277
        %v283 = vadd.s32 %v240, 4294967295
        %v284 = vadd.s32 %v241, 4294967295
        %vm285 = vcmp.ge.s32.totalorder %v283, 0
        %vm286 = vcmp.ge.s32.totalorder %v284, 0
        %vm287 = vcmp.lt.s32.totalorder %v283, 16
        %vm288 = vcmp.lt.s32.totalorder %v284, 16
        %vm289 = vmand %vm285, %vm287
        %vm290 = vmand %vm286, %vm288
        %v291 = vsel %vm289, %v282, 0.0
        %v292 = vsel %vm290, %v281, 0.0
        %vm293 = vcmp.ge.s32.totalorder %v240, 0
        %vm294 = vcmp.ge.s32.totalorder %v241, 0
        %vm295 = vcmp.lt.s32.totalorder %v240, 16
        %vm296 = vcmp.lt.s32.totalorder %v241, 16
        %vm297 = vmand %vm293, %vm295
        %vm298 = vmand %vm294, %vm296
        %v299 = vsel %vm297, %v213, 0.0
        %v300 = vsel %vm298, %v220, 0.0
        %301 = vrot.lane.b32.xlu0 %v213, 127
        %v302 = vpop.permute.xlu0 %301
        %303 = vrot.lane.b32.xlu0 %v220, 127
        %v304 = vpop.permute.xlu0 %303
        %vm305 = vcmp.lt.s32.totalorder %v238, 127
        %v306 = vsel %vm305, %v302, %v304
        %v307 = vsel %vm305, %v304, %v302
        %v308 = vadd.s32 %v240, 1
        %v309 = vadd.s32 %v241, 1
        %vm310 = vcmp.ge.s32.totalorder %v308, 0
        %vm311 = vcmp.ge.s32.totalorder %v309, 0
        %vm312 = vcmp.lt.s32.totalorder %v308, 16
        %vm313 = vcmp.lt.s32.totalorder %v309, 16
        %vm314 = vmand %vm310, %vm312
        %vm315 = vmand %vm311, %vm313
        %v316 = vsel %vm314, %v306, 0.0
        %v317 = vsel %vm315, %v307, 0.0
        %318 = vrot.lane.b32.xlu0 %v213, 126
        %v319 = vpop.permute.xlu0 %318
        %320 = vrot.lane.b32.xlu0 %v220, 126
        %v321 = vpop.permute.xlu0 %320
        %vm322 = vcmp.lt.s32.totalorder %v238, 126
        %v323 = vsel %vm322, %v319, %v321
        %v324 = vsel %vm322, %v321, %v319
        %v325 = vadd.s32 %v240, 2
        %v326 = vadd.s32 %v241, 2
        %vm327 = vcmp.ge.s32.totalorder %v325, 0
        %vm328 = vcmp.ge.s32.totalorder %v326, 0
        %vm329 = vcmp.lt.s32.totalorder %v325, 16
        %vm330 = vcmp.lt.s32.totalorder %v326, 16
        %vm331 = vmand %vm327, %vm329
        %vm332 = vmand %vm328, %vm330
        %v333 = vsel %vm331, %v323, 0.0
        %v334 = vsel %vm332, %v324, 0.0
        %335 = vrot.lane.b32.xlu0 %v213, 125
        %v336 = vpop.permute.xlu0 %335
        %337 = vrot.lane.b32.xlu0 %v220, 125
        %v338 = vpop.permute.xlu0 %337
        %vm339 = vcmp.lt.s32.totalorder %v238, 125
        %v340 = vsel %vm339, %v336, %v338
        %v341 = vsel %vm339, %v338, %v336
        %v342 = vadd.s32 %v240, 3
        %v343 = vadd.s32 %v241, 3
        %vm344 = vcmp.ge.s32.totalorder %v342, 0
        %vm345 = vcmp.ge.s32.totalorder %v343, 0
        %vm346 = vcmp.lt.s32.totalorder %v342, 16
        %vm347 = vcmp.lt.s32.totalorder %v343, 16
        %vm348 = vmand %vm344, %vm346
        %vm349 = vmand %vm345, %vm347
        %v350 = vsel %vm348, %v340, 0.0
        %v351 = vsel %vm349, %v341, 0.0
        %352 = vrot.lane.b32.xlu0 %v235, 3
        %v353 = vpop.permute.xlu0 %352
        %354 = vrot.lane.b32.xlu0 %v236, 3
        %v355 = vpop.permute.xlu0 %354
        %v356 = vsel %vm246, %v353, %v355
        %v357 = vsel %vm246, %v355, %v353
        %v358 = vsel %vm255, %v357, 0.0
        %v359 = vsel %vm256, %v356, 0.0
        %360 = vrot.lane.b32.xlu0 %v235, 2
        %v361 = vpop.permute.xlu0 %360
        %362 = vrot.lane.b32.xlu0 %v236, 2
        %v363 = vpop.permute.xlu0 %362
        %v364 = vsel %vm263, %v361, %v363
        %v365 = vsel %vm263, %v363, %v361
        %v366 = vsel %vm272, %v365, 0.0
        %v367 = vsel %vm273, %v364, 0.0
        %368 = vrot.lane.b32.xlu0 %v235, 1
        %v369 = vpop.permute.xlu0 %368
        %370 = vrot.lane.b32.xlu0 %v236, 1
        %v371 = vpop.permute.xlu0 %370
        %v372 = vsel %vm280, %v369, %v371
        %v373 = vsel %vm280, %v371, %v369
        %v374 = vsel %vm289, %v373, 0.0
        %v375 = vsel %vm290, %v372, 0.0
        %v376 = vsel %vm297, %v235, 0.0
        %v377 = vsel %vm298, %v236, 0.0
        %378 = vrot.lane.b32.xlu0 %v235, 127
        %v379 = vpop.permute.xlu0 %378
        %380 = vrot.lane.b32.xlu0 %v236, 127
        %v381 = vpop.permute.xlu0 %380
        %v382 = vsel %vm305, %v379, %v381
        %v383 = vsel %vm305, %v381, %v379
        %v384 = vsel %vm314, %v382, 0.0
        %v385 = vsel %vm315, %v383, 0.0
        %386 = vrot.lane.b32.xlu0 %v235, 126
        %v387 = vpop.permute.xlu0 %386
        %388 = vrot.lane.b32.xlu0 %v236, 126
        %v389 = vpop.permute.xlu0 %388
        %v390 = vsel %vm322, %v387, %v389
        %v391 = vsel %vm322, %v389, %v387
        %v392 = vsel %vm331, %v390, 0.0
        %v393 = vsel %vm332, %v391, 0.0
        %394 = vrot.lane.b32.xlu0 %v235, 125
        %v395 = vpop.permute.xlu0 %394
        %396 = vrot.lane.b32.xlu0 %v236, 125
        %v397 = vpop.permute.xlu0 %396
        %v398 = vsel %vm339, %v395, %v397
        %v399 = vsel %vm339, %v397, %v395
        %v400 = vsel %vm348, %v398, 0.0
        %v401 = vsel %vm349, %v399, 0.0
        %s402 = sld [smem:[#allocation2]]
        %v403 = vstv %s402
        %s404 = sld [smem:[#allocation3]]
        %v405 = vstv %s404
        %v406 = vmul.f32 %v405, %v257
        %v407 = vmul.f32 %v405, %v258
        %v408 = vadd.f32 %v406, 0.0
        %v409 = vadd.f32 %v407, 0.0
        %s410 = sld [smem:[#allocation3 + $0x1]]
        %v411 = vstv %s410
        %v412 = vmul.f32 %v411, %v274
        %v413 = vmul.f32 %v411, %v275
        %v414 = vadd.f32 %v408, %v412
        %v415 = vadd.f32 %v409, %v413
        %s416 = sld [smem:[#allocation3 + $0x2]]
        %v417 = vstv %s416
        %v418 = vmul.f32 %v417, %v291
        %v419 = vmul.f32 %v417, %v292
        %v420 = vadd.f32 %v414, %v418
        %v421 = vadd.f32 %v415, %v419
        %s422 = sld [smem:[#allocation3 + $0x3]]
        %v423 = vstv %s422
        %v424 = vmul.f32 %v423, %v299
        %v425 = vmul.f32 %v423, %v300
        %v426 = vadd.f32 %v420, %v424
        %v427 = vadd.f32 %v421, %v425
        %s428 = sld [smem:[#allocation3 + $0x4]]
        %v429 = vstv %s428
        %v430 = vmul.f32 %v429, %v316
        %v431 = vmul.f32 %v429, %v317
        %v432 = vadd.f32 %v426, %v430
        %v433 = vadd.f32 %v427, %v431
        %s434 = sld [smem:[#allocation3 + $0x5]]
        %v435 = vstv %s434
        %v436 = vmul.f32 %v435, %v333
        %v437 = vmul.f32 %v435, %v334
        %v438 = vadd.f32 %v432, %v436
        %v439 = vadd.f32 %v433, %v437
        %s440 = sld [smem:[#allocation3 + $0x6]]
        %v441 = vstv %s440
        %v442 = vmul.f32 %v441, %v350
        %v443 = vmul.f32 %v441, %v351
        %v444 = vadd.f32 %v438, %v442
        %v445 = vadd.f32 %v439, %v443
        %s446 = sld [smem:[#allocation3 + $0x31]]
        %v447 = vstv %s446
        %v448 = vmul.f32 %v447, %v358
        %v449 = vmul.f32 %v447, %v359
        %v450 = vadd.f32 %v444, %v448
        %v451 = vadd.f32 %v445, %v449
        %s452 = sld [smem:[#allocation3 + $0x32]]
        %v453 = vstv %s452
        %v454 = vmul.f32 %v453, %v366
        %v455 = vmul.f32 %v453, %v367
        %v456 = vadd.f32 %v450, %v454
        %v457 = vadd.f32 %v451, %v455
        %s458 = sld [smem:[#allocation3 + $0x33]]
        %v459 = vstv %s458
        %v460 = vmul.f32 %v459, %v374
        %v461 = vmul.f32 %v459, %v375
        %v462 = vadd.f32 %v456, %v460
        %v463 = vadd.f32 %v457, %v461
        %s464 = sld [smem:[#allocation3 + $0x34]]
        %v465 = vstv %s464
        %v466 = vmul.f32 %v465, %v376
        %v467 = vmul.f32 %v465, %v377
        %v468 = vadd.f32 %v462, %v466
        %v469 = vadd.f32 %v463, %v467
        %s470 = sld [smem:[#allocation3 + $0x35]]
        %v471 = vstv %s470
        %v472 = vmul.f32 %v471, %v384
        %v473 = vmul.f32 %v471, %v385
        %v474 = vadd.f32 %v468, %v472
        %v475 = vadd.f32 %v469, %v473
        %s476 = sld [smem:[#allocation3 + $0x36]]
        %v477 = vstv %s476
        %v478 = vmul.f32 %v477, %v392
        %v479 = vmul.f32 %v477, %v393
        %v480 = vadd.f32 %v474, %v478
        %v481 = vadd.f32 %v475, %v479
        %s482 = sld [smem:[#allocation3 + $0x37]]
        %v483 = vstv %s482
        %v484 = vmul.f32 %v483, %v400
        %v485 = vmul.f32 %v483, %v401
        %v486 = vadd.f32 %v480, %v484
        %v487 = vadd.f32 %v481, %v485
        %488 = vrot.lane.b32.xlu0 %v486, 48
        %v489 = vpop.permute.xlu0 %488
        %490 = vrot.lane.b32.xlu0 %v487, 48
        %v491 = vpop.permute.xlu0 %490
        %vm492 = vcmp.lt.s32.totalorder %v238, 48
        %v493 = vsel %vm492, %v489, %v491
        %v494 = vsel %vm492, %v491, %v489
        %v495 = vadd.s32 %v238, 4294967248
        %v496 = vadd.s32 %v239, 4294967248
        %vm497 = vcmp.ge.s32.totalorder %v495, 0
        %vm498 = vcmp.ge.s32.totalorder %v496, 0
        %vm499 = vcmp.lt.s32.totalorder %v495, 256
        %vm500 = vcmp.lt.s32.totalorder %v496, 256
        %vm501 = vmand %vm497, %vm499
        %vm502 = vmand %vm498, %vm500
        %v503 = vsel %vm501, %v494, 0.0
        %v504 = vsel %vm502, %v493, 0.0
        %v505 = vadd.f32 %v403, %v503
        %v506 = vadd.f32 %v403, %v504
        %s507 = sld [smem:[#allocation3 + $0x7]]
        %v508 = vstv %s507
        %v509 = vmul.f32 %v508, %v257
        %v510 = vmul.f32 %v508, %v258
        %v511 = vadd.f32 %v509, 0.0
        %v512 = vadd.f32 %v510, 0.0
        %s513 = sld [smem:[#allocation3 + $0x8]]
        %v514 = vstv %s513
        %v515 = vmul.f32 %v514, %v274
        %v516 = vmul.f32 %v514, %v275
        %v517 = vadd.f32 %v511, %v515
        %v518 = vadd.f32 %v512, %v516
        %s519 = sld [smem:[#allocation3 + $0x9]]
        %v520 = vstv %s519
        %v521 = vmul.f32 %v520, %v291
        %v522 = vmul.f32 %v520, %v292
        %v523 = vadd.f32 %v517, %v521
        %v524 = vadd.f32 %v518, %v522
        %s525 = sld [smem:[#allocation3 + $0xa]]
        %v526 = vstv %s525
        %v527 = vmul.f32 %v526, %v299
        %v528 = vmul.f32 %v526, %v300
        %v529 = vadd.f32 %v523, %v527
        %v530 = vadd.f32 %v524, %v528
        %s531 = sld [smem:[#allocation3 + $0xb]]
        %v532 = vstv %s531
        %v533 = vmul.f32 %v532, %v316
        %v534 = vmul.f32 %v532, %v317
        %v535 = vadd.f32 %v529, %v533
        %v536 = vadd.f32 %v530, %v534
        %s537 = sld [smem:[#allocation3 + $0xc]]
        %v538 = vstv %s537
        %v539 = vmul.f32 %v538, %v333
        %v540 = vmul.f32 %v538, %v334
        %v541 = vadd.f32 %v535, %v539
        %v542 = vadd.f32 %v536, %v540
        %s543 = sld [smem:[#allocation3 + $0xd]]
        %v544 = vstv %s543
        %v545 = vmul.f32 %v544, %v350
        %v546 = vmul.f32 %v544, %v351
        %v547 = vadd.f32 %v541, %v545
        %v548 = vadd.f32 %v542, %v546
        %s549 = sld [smem:[#allocation3 + $0x38]]
        %v550 = vstv %s549
        %v551 = vmul.f32 %v550, %v358
        %v552 = vmul.f32 %v550, %v359
        %v553 = vadd.f32 %v547, %v551
        %v554 = vadd.f32 %v548, %v552
        %s555 = sld [smem:[#allocation3 + $0x39]]
        %v556 = vstv %s555
        %v557 = vmul.f32 %v556, %v366
        %v558 = vmul.f32 %v556, %v367
        %v559 = vadd.f32 %v553, %v557
        %v560 = vadd.f32 %v554, %v558
        %s561 = sld [smem:[#allocation3 + $0x3a]]
        %v562 = vstv %s561
        %v563 = vmul.f32 %v562, %v374
        %v564 = vmul.f32 %v562, %v375
        %v565 = vadd.f32 %v559, %v563
        %v566 = vadd.f32 %v560, %v564
        %s567 = sld [smem:[#allocation3 + $0x3b]]
        %v568 = vstv %s567
        %v569 = vmul.f32 %v568, %v376
        %v570 = vmul.f32 %v568, %v377
        %v571 = vadd.f32 %v565, %v569
        %v572 = vadd.f32 %v566, %v570
        %s573 = sld [smem:[#allocation3 + $0x3c]]
        %v574 = vstv %s573
        %v575 = vmul.f32 %v574, %v384
        %v576 = vmul.f32 %v574, %v385
        %v577 = vadd.f32 %v571, %v575
        %v578 = vadd.f32 %v572, %v576
        %s579 = sld [smem:[#allocation3 + $0x3d]]
        %v580 = vstv %s579
        %v581 = vmul.f32 %v580, %v392
        %v582 = vmul.f32 %v580, %v393
        %v583 = vadd.f32 %v577, %v581
        %v584 = vadd.f32 %v578, %v582
        %s585 = sld [smem:[#allocation3 + $0x3e]]
        %v586 = vstv %s585
        %v587 = vmul.f32 %v586, %v400
        %v588 = vmul.f32 %v586, %v401
        %v589 = vadd.f32 %v583, %v587
        %v590 = vadd.f32 %v584, %v588
        %591 = vrot.lane.b32.xlu0 %v589, 32
        %v592 = vpop.permute.xlu0 %591
        %593 = vrot.lane.b32.xlu0 %v590, 32
        %v594 = vpop.permute.xlu0 %593
        %vm595 = vcmp.lt.s32.totalorder %v238, 32
        %v596 = vsel %vm595, %v592, %v594
        %v597 = vsel %vm595, %v594, %v592
        %v598 = vadd.s32 %v238, 4294967264
        %v599 = vadd.s32 %v239, 4294967264
        %vm600 = vcmp.ge.s32.totalorder %v598, 0
        %vm601 = vcmp.ge.s32.totalorder %v599, 0
        %vm602 = vcmp.lt.s32.totalorder %v598, 256
        %vm603 = vcmp.lt.s32.totalorder %v599, 256
        %vm604 = vmand %vm600, %vm602
        %vm605 = vmand %vm601, %vm603
        %v606 = vsel %vm604, %v597, 0.0
        %v607 = vsel %vm605, %v596, 0.0
        %v608 = vadd.f32 %v505, %v606
        %v609 = vadd.f32 %v506, %v607
        %s610 = sld [smem:[#allocation3 + $0xe]]
        %v611 = vstv %s610
        %v612 = vmul.f32 %v611, %v257
        %v613 = vmul.f32 %v611, %v258
        %v614 = vadd.f32 %v612, 0.0
        %v615 = vadd.f32 %v613, 0.0
        %s616 = sld [smem:[#allocation3 + $0xf]]
        %v617 = vstv %s616
        %v618 = vmul.f32 %v617, %v274
        %v619 = vmul.f32 %v617, %v275
        %v620 = vadd.f32 %v614, %v618
        %v621 = vadd.f32 %v615, %v619
        %s622 = sld [smem:[#allocation3 + $0x10]]
        %v623 = vstv %s622
        %v624 = vmul.f32 %v623, %v291
        %v625 = vmul.f32 %v623, %v292
        %v626 = vadd.f32 %v620, %v624
        %v627 = vadd.f32 %v621, %v625
        %s628 = sld [smem:[#allocation3 + $0x11]]
        %v629 = vstv %s628
        %v630 = vmul.f32 %v629, %v299
        %v631 = vmul.f32 %v629, %v300
        %v632 = vadd.f32 %v626, %v630
        %v633 = vadd.f32 %v627, %v631
        %s634 = sld [smem:[#allocation3 + $0x12]]
        %v635 = vstv %s634
        %v636 = vmul.f32 %v635, %v316
        %v637 = vmul.f32 %v635, %v317
        %v638 = vadd.f32 %v632, %v636
        %v639 = vadd.f32 %v633, %v637
        %s640 = sld [smem:[#allocation3 + $0x13]]
        %v641 = vstv %s640
        %v642 = vmul.f32 %v641, %v333
        %v643 = vmul.f32 %v641, %v334
        %v644 = vadd.f32 %v638, %v642
        %v645 = vadd.f32 %v639, %v643
        %s646 = sld [smem:[#allocation3 + $0x14]]
        %v647 = vstv %s646
        %v648 = vmul.f32 %v647, %v350
        %v649 = vmul.f32 %v647, %v351
        %v650 = vadd.f32 %v644, %v648
        %v651 = vadd.f32 %v645, %v649
        %s652 = sld [smem:[#allocation3 + $0x3f]]
        %v653 = vstv %s652
        %v654 = vmul.f32 %v653, %v358
        %v655 = vmul.f32 %v653, %v359
        %v656 = vadd.f32 %v650, %v654
        %v657 = vadd.f32 %v651, %v655
        %s658 = sld [smem:[#allocation3 + $0x40]]
        %v659 = vstv %s658
        %v660 = vmul.f32 %v659, %v366
        %v661 = vmul.f32 %v659, %v367
        %v662 = vadd.f32 %v656, %v660
        %v663 = vadd.f32 %v657, %v661
        %s664 = sld [smem:[#allocation3 + $0x41]]
        %v665 = vstv %s664
        %v666 = vmul.f32 %v665, %v374
        %v667 = vmul.f32 %v665, %v375
        %v668 = vadd.f32 %v662, %v666
        %v669 = vadd.f32 %v663, %v667
        %s670 = sld [smem:[#allocation3 + $0x42]]
        %v671 = vstv %s670
        %v672 = vmul.f32 %v671, %v376
        %v673 = vmul.f32 %v671, %v377
        %v674 = vadd.f32 %v668, %v672
        %v675 = vadd.f32 %v669, %v673
        %s676 = sld [smem:[#allocation3 + $0x43]]
        %v677 = vstv %s676
        %v678 = vmul.f32 %v677, %v384
        %v679 = vmul.f32 %v677, %v385
        %v680 = vadd.f32 %v674, %v678
        %v681 = vadd.f32 %v675, %v679
        %s682 = sld [smem:[#allocation3 + $0x44]]
        %v683 = vstv %s682
        %v684 = vmul.f32 %v683, %v392
        %v685 = vmul.f32 %v683, %v393
        %v686 = vadd.f32 %v680, %v684
        %v687 = vadd.f32 %v681, %v685
        %s688 = sld [smem:[#allocation3 + $0x45]]
        %v689 = vstv %s688
        %v690 = vmul.f32 %v689, %v400
        %v691 = vmul.f32 %v689, %v401
        %v692 = vadd.f32 %v686, %v690
        %v693 = vadd.f32 %v687, %v691
        %694 = vrot.lane.b32.xlu0 %v692, 16
        %v695 = vpop.permute.xlu0 %694
        %696 = vrot.lane.b32.xlu0 %v693, 16
        %v697 = vpop.permute.xlu0 %696
        %vm698 = vcmp.lt.s32.totalorder %v238, 16
        %v699 = vsel %vm698, %v695, %v697
        %v700 = vsel %vm698, %v697, %v695
        %v701 = vadd.s32 %v238, 4294967280
        %v702 = vadd.s32 %v239, 4294967280
        %vm703 = vcmp.ge.s32.totalorder %v701, 0
        %vm704 = vcmp.ge.s32.totalorder %v702, 0
        %vm705 = vcmp.lt.s32.totalorder %v701, 256
        %vm706 = vcmp.lt.s32.totalorder %v702, 256
        %vm707 = vmand %vm703, %vm705
        %vm708 = vmand %vm704, %vm706
        %v709 = vsel %vm707, %v700, 0.0
        %v710 = vsel %vm708, %v699, 0.0
        %v711 = vadd.f32 %v608, %v709
        %v712 = vadd.f32 %v609, %v710
        %s713 = sld [smem:[#allocation3 + $0x15]]
        %v714 = vstv %s713
        %v715 = vmul.f32 %v714, %v257
        %v716 = vmul.f32 %v714, %v258
        %v717 = vadd.f32 %v715, 0.0
        %v718 = vadd.f32 %v716, 0.0
        %s719 = sld [smem:[#allocation3 + $0x16]]
        %v720 = vstv %s719
        %v721 = vmul.f32 %v720, %v274
        %v722 = vmul.f32 %v720, %v275
        %v723 = vadd.f32 %v717, %v721
        %v724 = vadd.f32 %v718, %v722
        %s725 = sld [smem:[#allocation3 + $0x17]]
        %v726 = vstv %s725
        %v727 = vmul.f32 %v726, %v291
        %v728 = vmul.f32 %v726, %v292
        %v729 = vadd.f32 %v723, %v727
        %v730 = vadd.f32 %v724, %v728
        %s731 = sld [smem:[#allocation3 + $0x18]]
        %v732 = vstv %s731
        %v733 = vmul.f32 %v732, %v299
        %v734 = vmul.f32 %v732, %v300
        %v735 = vadd.f32 %v729, %v733
        %v736 = vadd.f32 %v730, %v734
        %s737 = sld [smem:[#allocation3 + $0x19]]
        %v738 = vstv %s737
        %v739 = vmul.f32 %v738, %v316
        %v740 = vmul.f32 %v738, %v317
        %v741 = vadd.f32 %v735, %v739
        %v742 = vadd.f32 %v736, %v740
        %s743 = sld [smem:[#allocation3 + $0x1a]]
        %v744 = vstv %s743
        %v745 = vmul.f32 %v744, %v333
        %v746 = vmul.f32 %v744, %v334
        %v747 = vadd.f32 %v741, %v745
        %v748 = vadd.f32 %v742, %v746
        %s749 = sld [smem:[#allocation3 + $0x1b]]
        %v750 = vstv %s749
        %v751 = vmul.f32 %v750, %v350
        %v752 = vmul.f32 %v750, %v351
        %v753 = vadd.f32 %v747, %v751
        %v754 = vadd.f32 %v748, %v752
        %s755 = sld [smem:[#allocation3 + $0x46]]
        %v756 = vstv %s755
        %v757 = vmul.f32 %v756, %v358
        %v758 = vmul.f32 %v756, %v359
        %v759 = vadd.f32 %v753, %v757
        %v760 = vadd.f32 %v754, %v758
        %s761 = sld [smem:[#allocation3 + $0x47]]
        %v762 = vstv %s761
        %v763 = vmul.f32 %v762, %v366
        %v764 = vmul.f32 %v762, %v367
        %v765 = vadd.f32 %v759, %v763
        %v766 = vadd.f32 %v760, %v764
        %s767 = sld [smem:[#allocation3 + $0x48]]
        %v768 = vstv %s767
        %v769 = vmul.f32 %v768, %v374
        %v770 = vmul.f32 %v768, %v375
        %v771 = vadd.f32 %v765, %v769
        %v772 = vadd.f32 %v766, %v770
        %s773 = sld [smem:[#allocation3 + $0x49]]
        %v774 = vstv %s773
        %v775 = vmul.f32 %v774, %v376
        %v776 = vmul.f32 %v774, %v377
        %v777 = vadd.f32 %v771, %v775
        %v778 = vadd.f32 %v772, %v776
        %s779 = sld [smem:[#allocation3 + $0x4a]]
        %v780 = vstv %s779
        %v781 = vmul.f32 %v780, %v384
        %v782 = vmul.f32 %v780, %v385
        %v783 = vadd.f32 %v777, %v781
        %v784 = vadd.f32 %v778, %v782
        %s785 = sld [smem:[#allocation3 + $0x4b]]
        %v786 = vstv %s785
        %v787 = vmul.f32 %v786, %v392
        %v788 = vmul.f32 %v786, %v393
        %v789 = vadd.f32 %v783, %v787
        %v790 = vadd.f32 %v784, %v788
        %s791 = sld [smem:[#allocation3 + $0x4c]]
        %v792 = vstv %s791
        %v793 = vmul.f32 %v792, %v400
        %v794 = vmul.f32 %v792, %v401
        %v795 = vadd.f32 %v789, %v793
        %v796 = vadd.f32 %v790, %v794
        %vm797 = vcmp.ge.s32.totalorder %v238, 0
        %vm798 = vcmp.ge.s32.totalorder %v239, 0
        %vm799 = vcmp.lt.s32.totalorder %v238, 256
        %vm800 = vcmp.lt.s32.totalorder %v239, 256
        %vm801 = vmand %vm797, %vm799
        %vm802 = vmand %vm798, %vm800
        %v803 = vsel %vm801, %v795, 0.0
        %v804 = vsel %vm802, %v796, 0.0
        %v805 = vadd.f32 %v711, %v803
        %v806 = vadd.f32 %v712, %v804
        %s807 = sld [smem:[#allocation3 + $0x1c]]
        %v808 = vstv %s807
        %v809 = vmul.f32 %v808, %v257
        %v810 = vmul.f32 %v808, %v258
        %v811 = vadd.f32 %v809, 0.0
        %v812 = vadd.f32 %v810, 0.0
        %s813 = sld [smem:[#allocation3 + $0x1d]]
        %v814 = vstv %s813
        %v815 = vmul.f32 %v814, %v274
        %v816 = vmul.f32 %v814, %v275
        %v817 = vadd.f32 %v811, %v815
        %v818 = vadd.f32 %v812, %v816
        %s819 = sld [smem:[#allocation3 + $0x1e]]
        %v820 = vstv %s819
        %v821 = vmul.f32 %v820, %v291
        %v822 = vmul.f32 %v820, %v292
        %v823 = vadd.f32 %v817, %v821
        %v824 = vadd.f32 %v818, %v822
        %s825 = sld [smem:[#allocation3 + $0x1f]]
        %v826 = vstv %s825
        %v827 = vmul.f32 %v826, %v299
        %v828 = vmul.f32 %v826, %v300
        %v829 = vadd.f32 %v823, %v827
        %v830 = vadd.f32 %v824, %v828
        %s831 = sld [smem:[#allocation3 + $0x20]]
        %v832 = vstv %s831
        %v833 = vmul.f32 %v832, %v316
        %v834 = vmul.f32 %v832, %v317
        %v835 = vadd.f32 %v829, %v833
        %v836 = vadd.f32 %v830, %v834
        %s837 = sld [smem:[#allocation3 + $0x21]]
        %v838 = vstv %s837
        %v839 = vmul.f32 %v838, %v333
        %v840 = vmul.f32 %v838, %v334
        %v841 = vadd.f32 %v835, %v839
        %v842 = vadd.f32 %v836, %v840
        %s843 = sld [smem:[#allocation3 + $0x22]]
        %v844 = vstv %s843
        %v845 = vmul.f32 %v844, %v350
        %v846 = vmul.f32 %v844, %v351
        %v847 = vadd.f32 %v841, %v845
        %v848 = vadd.f32 %v842, %v846
        %s849 = sld [smem:[#allocation3 + $0x4d]]
        %v850 = vstv %s849
        %v851 = vmul.f32 %v850, %v358
        %v852 = vmul.f32 %v850, %v359
        %v853 = vadd.f32 %v847, %v851
        %v854 = vadd.f32 %v848, %v852
        %s855 = sld [smem:[#allocation3 + $0x4e]]
        %v856 = vstv %s855
        %v857 = vmul.f32 %v856, %v366
        %v858 = vmul.f32 %v856, %v367
        %v859 = vadd.f32 %v853, %v857
        %v860 = vadd.f32 %v854, %v858
        %s861 = sld [smem:[#allocation3 + $0x4f]]
        %v862 = vstv %s861
        %v863 = vmul.f32 %v862, %v374
        %v864 = vmul.f32 %v862, %v375
        %v865 = vadd.f32 %v859, %v863
        %v866 = vadd.f32 %v860, %v864
        %s867 = sld [smem:[#allocation3 + $0x50]]
        %v868 = vstv %s867
        %v869 = vmul.f32 %v868, %v376
        %v870 = vmul.f32 %v868, %v377
        %v871 = vadd.f32 %v865, %v869
        %v872 = vadd.f32 %v866, %v870
        %s873 = sld [smem:[#allocation3 + $0x51]]
        %v874 = vstv %s873
        %v875 = vmul.f32 %v874, %v384
        %v876 = vmul.f32 %v874, %v385
        %v877 = vadd.f32 %v871, %v875
        %v878 = vadd.f32 %v872, %v876
        %s879 = sld [smem:[#allocation3 + $0x52]]
        %v880 = vstv %s879
        %v881 = vmul.f32 %v880, %v392
        %v882 = vmul.f32 %v880, %v393
        %v883 = vadd.f32 %v877, %v881
        %v884 = vadd.f32 %v878, %v882
        %s885 = sld [smem:[#allocation3 + $0x53]]
        %v886 = vstv %s885
        %v887 = vmul.f32 %v886, %v400
        %v888 = vmul.f32 %v886, %v401
        %v889 = vadd.f32 %v883, %v887
        %v890 = vadd.f32 %v884, %v888
        %891 = vrot.lane.b32.xlu0 %v889, 112
        %v892 = vpop.permute.xlu0 %891
        %893 = vrot.lane.b32.xlu0 %v890, 112
        %v894 = vpop.permute.xlu0 %893
        %vm895 = vcmp.lt.s32.totalorder %v238, 112
        %v896 = vsel %vm895, %v892, %v894
        %v897 = vsel %vm895, %v894, %v892
        %v898 = vadd.s32 %v238, 16
        %v899 = vadd.s32 %v239, 16
        %vm900 = vcmp.ge.s32.totalorder %v898, 0
        %vm901 = vcmp.ge.s32.totalorder %v899, 0
        %vm902 = vcmp.lt.s32.totalorder %v898, 256
        %vm903 = vcmp.lt.s32.totalorder %v899, 256
        %vm904 = vmand %vm900, %vm902
        %vm905 = vmand %vm901, %vm903
        %v906 = vsel %vm904, %v896, 0.0
        %v907 = vsel %vm905, %v897, 0.0
        %v908 = vadd.f32 %v805, %v906
        %v909 = vadd.f32 %v806, %v907
        %s910 = sld [smem:[#allocation3 + $0x23]]
        %v911 = vstv %s910
        %v912 = vmul.f32 %v911, %v257
        %v913 = vmul.f32 %v911, %v258
        %v914 = vadd.f32 %v912, 0.0
        %v915 = vadd.f32 %v913, 0.0
        %s916 = sld [smem:[#allocation3 + $0x24]]
        %v917 = vstv %s916
        %v918 = vmul.f32 %v917, %v274
        %v919 = vmul.f32 %v917, %v275
        %v920 = vadd.f32 %v914, %v918
        %v921 = vadd.f32 %v915, %v919
        %s922 = sld [smem:[#allocation3 + $0x25]]
        %v923 = vstv %s922
        %v924 = vmul.f32 %v923, %v291
        %v925 = vmul.f32 %v923, %v292
        %v926 = vadd.f32 %v920, %v924
        %v927 = vadd.f32 %v921, %v925
        %s928 = sld [smem:[#allocation3 + $0x26]]
        %v929 = vstv %s928
        %v930 = vmul.f32 %v929, %v299
        %v931 = vmul.f32 %v929, %v300
        %v932 = vadd.f32 %v926, %v930
        %v933 = vadd.f32 %v927, %v931
        %s934 = sld [smem:[#allocation3 + $0x27]]
        %v935 = vstv %s934
        %v936 = vmul.f32 %v935, %v316
        %v937 = vmul.f32 %v935, %v317
        %v938 = vadd.f32 %v932, %v936
        %v939 = vadd.f32 %v933, %v937
        %s940 = sld [smem:[#allocation3 + $0x28]]
        %v941 = vstv %s940
        %v942 = vmul.f32 %v941, %v333
        %v943 = vmul.f32 %v941, %v334
        %v944 = vadd.f32 %v938, %v942
        %v945 = vadd.f32 %v939, %v943
        %s946 = sld [smem:[#allocation3 + $0x29]]
        %v947 = vstv %s946
        %v948 = vmul.f32 %v947, %v350
        %v949 = vmul.f32 %v947, %v351
        %v950 = vadd.f32 %v944, %v948
        %v951 = vadd.f32 %v945, %v949
        %s952 = sld [smem:[#allocation3 + $0x54]]
        %v953 = vstv %s952
        %v954 = vmul.f32 %v953, %v358
        %v955 = vmul.f32 %v953, %v359
        %v956 = vadd.f32 %v950, %v954
        %v957 = vadd.f32 %v951, %v955
        %s958 = sld [smem:[#allocation3 + $0x55]]
        %v959 = vstv %s958
        %v960 = vmul.f32 %v959, %v366
        %v961 = vmul.f32 %v959, %v367
        %v962 = vadd.f32 %v956, %v960
        %v963 = vadd.f32 %v957, %v961
        %s964 = sld [smem:[#allocation3 + $0x56]]
        %v965 = vstv %s964
        %v966 = vmul.f32 %v965, %v374
        %v967 = vmul.f32 %v965, %v375
        %v968 = vadd.f32 %v962, %v966
        %v969 = vadd.f32 %v963, %v967
        %s970 = sld [smem:[#allocation3 + $0x57]]
        %v971 = vstv %s970
        %v972 = vmul.f32 %v971, %v376
        %v973 = vmul.f32 %v971, %v377
        %v974 = vadd.f32 %v968, %v972
        %v975 = vadd.f32 %v969, %v973
        %s976 = sld [smem:[#allocation3 + $0x58]]
        %v977 = vstv %s976
        %v978 = vmul.f32 %v977, %v384
        %v979 = vmul.f32 %v977, %v385
        %v980 = vadd.f32 %v974, %v978
        %v981 = vadd.f32 %v975, %v979
        %s982 = sld [smem:[#allocation3 + $0x59]]
        %v983 = vstv %s982
        %v984 = vmul.f32 %v983, %v392
        %v985 = vmul.f32 %v983, %v393
        %v986 = vadd.f32 %v980, %v984
        %v987 = vadd.f32 %v981, %v985
        %s988 = sld [smem:[#allocation3 + $0x5a]]
        %v989 = vstv %s988
        %v990 = vmul.f32 %v989, %v400
        %v991 = vmul.f32 %v989, %v401
        %v992 = vadd.f32 %v986, %v990
        %v993 = vadd.f32 %v987, %v991
        %994 = vrot.lane.b32.xlu0 %v992, 96
        %v995 = vpop.permute.xlu0 %994
        %996 = vrot.lane.b32.xlu0 %v993, 96
        %v997 = vpop.permute.xlu0 %996
        %vm998 = vcmp.lt.s32.totalorder %v238, 96
        %v999 = vsel %vm998, %v995, %v997
        %v1000 = vsel %vm998, %v997, %v995
        %v1001 = vadd.s32 %v238, 32
        %v1002 = vadd.s32 %v239, 32
        %vm1003 = vcmp.ge.s32.totalorder %v1001, 0
        %vm1004 = vcmp.ge.s32.totalorder %v1002, 0
        %vm1005 = vcmp.lt.s32.totalorder %v1001, 256
        %vm1006 = vcmp.lt.s32.totalorder %v1002, 256
        %vm1007 = vmand %vm1003, %vm1005
        %vm1008 = vmand %vm1004, %vm1006
        %v1009 = vsel %vm1007, %v999, 0.0
        %v1010 = vsel %vm1008, %v1000, 0.0
        %v1011 = vadd.f32 %v908, %v1009
        %v1012 = vadd.f32 %v909, %v1010
        %s1013 = sld [smem:[#allocation3 + $0x2a]]
        %v1014 = vstv %s1013
        %v1015 = vmul.f32 %v1014, %v257
        %v1016 = vmul.f32 %v1014, %v258
        %v1017 = vadd.f32 %v1015, 0.0
        %v1018 = vadd.f32 %v1016, 0.0
        %s1019 = sld [smem:[#allocation3 + $0x2b]]
        %v1020 = vstv %s1019
        %v1021 = vmul.f32 %v1020, %v274
        %v1022 = vmul.f32 %v1020, %v275
        %v1023 = vadd.f32 %v1017, %v1021
        %v1024 = vadd.f32 %v1018, %v1022
        %s1025 = sld [smem:[#allocation3 + $0x2c]]
        %v1026 = vstv %s1025
        %v1027 = vmul.f32 %v1026, %v291
        %v1028 = vmul.f32 %v1026, %v292
        %v1029 = vadd.f32 %v1023, %v1027
        %v1030 = vadd.f32 %v1024, %v1028
        %s1031 = sld [smem:[#allocation3 + $0x2d]]
        %v1032 = vstv %s1031
        %v1033 = vmul.f32 %v1032, %v299
        %v1034 = vmul.f32 %v1032, %v300
        %v1035 = vadd.f32 %v1029, %v1033
        %v1036 = vadd.f32 %v1030, %v1034
        %s1037 = sld [smem:[#allocation3 + $0x2e]]
        %v1038 = vstv %s1037
        %v1039 = vmul.f32 %v1038, %v316
        %v1040 = vmul.f32 %v1038, %v317
        %v1041 = vadd.f32 %v1035, %v1039
        %v1042 = vadd.f32 %v1036, %v1040
        %s1043 = sld [smem:[#allocation3 + $0x2f]]
        %v1044 = vstv %s1043
        %v1045 = vmul.f32 %v1044, %v333
        %v1046 = vmul.f32 %v1044, %v334
        %v1047 = vadd.f32 %v1041, %v1045
        %v1048 = vadd.f32 %v1042, %v1046
        %s1049 = sld [smem:[#allocation3 + $0x30]]
        %v1050 = vstv %s1049
        %v1051 = vmul.f32 %v1050, %v350
        %v1052 = vmul.f32 %v1050, %v351
        %v1053 = vadd.f32 %v1047, %v1051
        %v1054 = vadd.f32 %v1048, %v1052
        %s1055 = sld [smem:[#allocation3 + $0x5b]]
        %v1056 = vstv %s1055
        %v1057 = vmul.f32 %v1056, %v358
        %v1058 = vmul.f32 %v1056, %v359
        %v1059 = vadd.f32 %v1053, %v1057
        %v1060 = vadd.f32 %v1054, %v1058
        %s1061 = sld [smem:[#allocation3 + $0x5c]]
        %v1062 = vstv %s1061
        %v1063 = vmul.f32 %v1062, %v366
        %v1064 = vmul.f32 %v1062, %v367
        %v1065 = vadd.f32 %v1059, %v1063
        %v1066 = vadd.f32 %v1060, %v1064
        %s1067 = sld [smem:[#allocation3 + $0x5d]]
        %v1068 = vstv %s1067
        %v1069 = vmul.f32 %v1068, %v374
        %v1070 = vmul.f32 %v1068, %v375
        %v1071 = vadd.f32 %v1065, %v1069
        %v1072 = vadd.f32 %v1066, %v1070
        %s1073 = sld [smem:[#allocation3 + $0x5e]]
        %v1074 = vstv %s1073
        %v1075 = vmul.f32 %v1074, %v376
        %v1076 = vmul.f32 %v1074, %v377
        %v1077 = vadd.f32 %v1071, %v1075
        %v1078 = vadd.f32 %v1072, %v1076
        %s1079 = sld [smem:[#allocation3 + $0x5f]]
        %v1080 = vstv %s1079
        %v1081 = vmul.f32 %v1080, %v384
        %v1082 = vmul.f32 %v1080, %v385
        %v1083 = vadd.f32 %v1077, %v1081
        %v1084 = vadd.f32 %v1078, %v1082
        %s1085 = sld [smem:[#allocation3 + $0x60]]
        %v1086 = vstv %s1085
        %v1087 = vmul.f32 %v1086, %v392
        %v1088 = vmul.f32 %v1086, %v393
        %v1089 = vadd.f32 %v1083, %v1087
        %v1090 = vadd.f32 %v1084, %v1088
        %s1091 = sld [smem:[#allocation3 + $0x61]]
        %v1092 = vstv %s1091
        %v1093 = vmul.f32 %v1092, %v400
        %v1094 = vmul.f32 %v1092, %v401
        %v1095 = vadd.f32 %v1089, %v1093
        %v1096 = vadd.f32 %v1090, %v1094
        %1097 = vrot.lane.b32.xlu0 %v1095, 80
        %v1098 = vpop.permute.xlu0 %1097
        %1099 = vrot.lane.b32.xlu0 %v1096, 80
        %v1100 = vpop.permute.xlu0 %1099
        %vm1101 = vcmp.lt.s32.totalorder %v238, 80
        %v1102 = vsel %vm1101, %v1098, %v1100
        %v1103 = vsel %vm1101, %v1100, %v1098
        %v1104 = vadd.s32 %v238, 48
        %v1105 = vadd.s32 %v239, 48
        %vm1106 = vcmp.ge.s32.totalorder %v1104, 0
        %vm1107 = vcmp.ge.s32.totalorder %v1105, 0
        %vm1108 = vcmp.lt.s32.totalorder %v1104, 256
        %vm1109 = vcmp.lt.s32.totalorder %v1105, 256
        %vm1110 = vmand %vm1106, %vm1108
        %vm1111 = vmand %vm1107, %vm1109
        %v1112 = vsel %vm1110, %v1102, 0.0
        %v1113 = vsel %vm1111, %v1103, 0.0
        %v1114 = vadd.f32 %v1011, %v1112
        %v1115 = vadd.f32 %v1012, %v1113
        %v1116 = vxor.u32 %v1114, 2147483648
        %v1117 = vxor.u32 %v1115, 2147483648
        %v1118 = vmul.f32 %v1116, 1.442695
        %v1119 = vpow.pop %v1118
        %v1120 = vmul.f32 %v1117, 1.442695
        %v1121 = vpow.pop %v1120
        %v1122 = vadd.f32 %v1119, 1.0
        %v1123 = vadd.f32 %v1121, 1.0
        %v1124 = vrcp.pop %v1122
        %v1125 = vmul.f32 1.0, %v1124
        %v1126 = vrcp.pop %v1123
        %v1127 = vmul.f32 1.0, %v1126
        %v1128 = vlaneseq
        %v1129 = vshrl.u32 %v1128, 7
        %v1130 = vsub.s32 0, %v1129
        %v1131 = vrot.slane %v1125, %v1130
        %v1132 = vlaneseq
        %v1133 = vshrl.u32 %v1132, 7
        %v1134 = vsub.s32 0, %v1133
        %v1135 = vrot.slane %v1127, %v1134
        %v1138 = vcombine.low %v1131, %v1135
        %v1140 = vmul.f32 %v202, %v1138
        %1141 = vst [vmem:[%s201] sm:$0xff] %v1140
        %s1142 = sand.u32 %s98, 1
        %s1143 = scalar_lea.sflag [#allocation5], %s1142
        %s1144 = sand.u32 %s98, 1
        %s1145 = smul.addr %s1144, 8
        %s1146 = scalar_lea.vmem [#allocation8], %s1145
        // Predicated region
        $region41: #{tpu_custom_call.1} parent=31 // pred_check
          %p1147 = pneg %p108
        $region42: #{tpu_custom_call.1} parent=31 // pred_check_branch
          %1149 = sbr.rel (%p1147) target = $region44
        $region43: #{tpu_custom_call.1} parent=31 // pred_region
          %s1151 = ssub.s32 128, 128
          %1152 = vsyncadd %s1143, %s1151
          %s1153 = smul.addr %s22, 2
          %s1154 = smul.addr %s1153, 64
          %s1155 = scalar_lea.hbm %s3, %s1154
          %s1157 = sshll.u32 %s1146, 4
          %s1158 = int_to_ptr.vmem [resolvable:$true] %s1157
          %1160 = dma.vmem_to_hbm [thread:$0]  %s1158, 128, %s1155, %s1143
        $region44: #{tpu_custom_call.1} parent=31 // pred_fallthru
          _
      $region32: #{tpu_custom_call.1} parent=5 // pred_fallthru
        _
      %p1161 = scmp.le.s32.totalorder 2, %s17
      // Predicated region
      $region45: #{tpu_custom_call.1} parent=5 // pred_check
        %p1162 = pneg %p1161
      $region46: #{tpu_custom_call.1} parent=5 // pred_check_branch
        %1164 = sbr.rel (%p1162) target = $region48
      $region47: #{tpu_custom_call.1} parent=5 // pred_region
        %s1165 = ssub.s32 %s17, 2
        // Predicated region
        $region49: #{tpu_custom_call.1} parent=47 // pred_check
          %p1166 = pneg %p114
        $region50: #{tpu_custom_call.1} parent=47 // pred_check_branch
          %1168 = sbr.rel (%p1166) target = $region52
        $region51: #{tpu_custom_call.1} parent=47 // pred_region
          %s1169 = sand.u32 %s99, 1
          %s1170 = scalar_lea.sflag [#allocation5], %s1169
          %s1171 = sand.u32 %s99, 1
          %s1172 = smul.addr %s1171, 8
          %s1173 = scalar_lea.vmem [#allocation8], %s1172
          %1174 = dma.done %s1170, 128
        $region52: #{tpu_custom_call.1} parent=47 // pred_fallthru
          _
      $region48: #{tpu_custom_call.1} parent=5 // pred_fallthru
        _
    $region6: #{tpu_custom_call.1} parent=1 // loop_footer
      %s21 = sadd.s32 1, %s17
    $region7: #{tpu_custom_call.1} parent=1 // loop_footer_branch
      %16 = sbr.rel target = $region3
    $region8: #{tpu_custom_call.1} parent=1 // loop_exit
      _
    %1175 = vsyncpa [#allocation4], 1
    %s1176 = scalar_lea.sflag [#allocation4], 1
    %1177 = vsyncpa %s1176, 1
    %1178 = vsyncpa [#allocation5], 1
    %s1179 = scalar_lea.sflag [#allocation5], 1
    %1180 = vsyncpa %s1179, 1
    %1181 = vsyncpa [#allocation6], 1
    %s1182 = scalar_lea.sflag [#allocation6], 1
    %1183 = vsyncpa %s1182, 1

</llo_original>
